<compile_context>
chip_gen: v5e
topology: v5e:2x2
jax: 0.10.0
libtpu: 0.0.40
codegen_flags: <defaults>
</compile_context>

<pallas_src>
import jax
import jax.numpy as jnp
from jax.experimental import pallas as pl
from jax.experimental.pallas import tpu as pltpu

_EPS = 1e-5
_VMEM_LIMIT = 32 * 1024 * 1024  # explicit; re-derive per generation at real shapes


# --------------------------------------------------------------------------
# Pass 1: conv1 (fused K=9*Cin matmul per image) + BN1 partial statistics.
# --------------------------------------------------------------------------
def _make_conv1_kernel(*, stride, H_out, W_out, Cin):
    s = stride
    HW = H_out * W_out
    inv_hw = 1.0 / float(HW)

    def kernel(ph_ref, w1_ref, y_ref, sum_ref, sq_ref, shift_ref):
        n = pl.program_id(0)

        # im2col patch (HW, 9*Cin) built from unit-stride tap slices of the
        # phase-decomposed padded input; one fused-K MXU dot per image.
        taps = []
        for k in range(9):
            dy, dx = divmod(k, 3)
            p = (dy % s) * s + (dx % s)
            r0, c0 = dy // s, dx // s
            tap = ph_ref[p, 0, r0:r0 + H_out, c0:c0 + W_out, :]
            taps.append(tap.reshape(HW, Cin))
        patch = jnp.concatenate(taps, axis=-1)
        y = jnp.dot(patch, w1_ref[...], preferred_element_type=jnp.float32)
        y_ref[0] = y.astype(y_ref.dtype)

        # Shifted one-pass BN1 statistics (shift = channel mean of image 0),
        # accumulated in f32 across the sequential batch grid.
        @pl.when(n == 0)
        def _():
            shift_ref[...] = jnp.sum(y, axis=0, keepdims=True) * inv_hw
            sum_ref[...] = jnp.zeros(sum_ref.shape, sum_ref.dtype)
            sq_ref[...] = jnp.zeros(sq_ref.shape, sq_ref.dtype)

        d = y - shift_ref[...]
        sum_ref[...] += jnp.sum(d, axis=0, keepdims=True)
        sq_ref[...] += jnp.sum(d * d, axis=0, keepdims=True)

    return kernel


# --------------------------------------------------------------------------
# Pass 2: BN1 (folded affine) -> ReLU -> conv2 (fused K=9*Cout) + BN2 stats.
# --------------------------------------------------------------------------
def _make_conv2_kernel(*, H_out, W_out, Cout):
    HW = H_out * W_out
    inv_hw = 1.0 / float(HW)

    def kernel(y1_ref, a1_ref, c1_ref, w2_ref,
               z_ref, sum_ref, sq_ref, shift_ref, pad_ref):
        n = pl.program_id(0)

        @pl.when(n == 0)
        def _():
            # Halo stays zero for the whole batch; interior rewritten per image.
            pad_ref[...] = jnp.zeros(pad_ref.shape, pad_ref.dtype)

        # BN1 (scale/shift folded in the wrapper) + ReLU in f32.
        y = y1_ref[0].astype(jnp.float32)
        act = jnp.maximum(y * a1_ref[...] + c1_ref[...], 0.0)
        pad_ref[1:1 + H_out, 1:1 + W_out, :] = (
            act.reshape(H_out, W_out, Cout).astype(pad_ref.dtype))

        # conv2: one fused (HW, 9*Cout) x (9*Cout, Cout) matmul per image.
        taps = []
        for k in range(9):
            dy, dx = divmod(k, 3)
            taps.append(pad_ref[dy:dy + H_out, dx:dx + W_out, :].reshape(HW, Cout))
        patch = jnp.concatenate(taps, axis=-1)
        z = jnp.dot(patch, w2_ref[...], preferred_element_type=jnp.float32)
        z_ref[0] = z.astype(z_ref.dtype)

        # Shifted one-pass BN2 statistics.
        @pl.when(n == 0)
        def _():
            shift_ref[...] = jnp.sum(z, axis=0, keepdims=True) * inv_hw
            sum_ref[...] = jnp.zeros(sum_ref.shape, sum_ref.dtype)
            sq_ref[...] = jnp.zeros(sq_ref.shape, sq_ref.dtype)

        d = z - shift_ref[...]
        sum_ref[...] += jnp.sum(d, axis=0, keepdims=True)
        sq_ref[...] += jnp.sum(d * d, axis=0, keepdims=True)

    return kernel


# --------------------------------------------------------------------------
# Pass 3: BN2 (folded affine) + shortcut + ReLU.  No carried state -> parallel.
# --------------------------------------------------------------------------
def _make_epilogue_kernel(*, H_out, W_out, Cin, off, has_ds, compute_dtype):
    HW = H_out * W_out

    def kernel(*refs):
        if has_ds:
            z_ref, a2_ref, c2_ref, ph_ref, wd_ref, o_ref = refs
            xs = ph_ref[0, 0, off:off + H_out, off:off + W_out, :].reshape(HW, Cin)
            sc = jnp.dot(xs.astype(compute_dtype), wd_ref[...],
                         preferred_element_type=jnp.float32)
        else:
            z_ref, a2_ref, c2_ref, x_ref, o_ref = refs
            sc = x_ref[0]  # f32 identity shortcut, read straight from the input
        z = z_ref[0].astype(jnp.float32)
        o_ref[0] = jnp.maximum(z * a2_ref[...] + c2_ref[...] + sc, 0.0)

    return kernel


def init_params(key, in_channels, out_channels, stride):
    """Deterministic synthetic parameters (PyTorch-equivalent shapes, HWIO)."""
    k1, k2, k3 = jax.random.split(key, 3)
    w1 = jax.random.normal(k1, (3, 3, in_channels, out_channels), jnp.float32) * 0.1
    w2 = jax.random.normal(k2, (3, 3, out_channels, out_channels), jnp.float32) * 0.1
    if stride != 1 or in_channels != out_channels:
        wd = jax.random.normal(k3, (in_channels, out_channels), jnp.float32) * 0.1
    else:
        wd = None  # PyTorch down_sample is None -> identity shortcut
    g1 = jnp.ones((out_channels,), jnp.float32)
    b1 = jnp.zeros((out_channels,), jnp.float32)
    g2 = jnp.ones((out_channels,), jnp.float32)
    b2 = jnp.zeros((out_channels,), jnp.float32)
    return (w1, g1, b1, w2, g2, b2, wd)


def residual_block(x_nchw, params, stride, *, compute_dtype=jnp.bfloat16):
    """NCHW in / NCHW out, mirroring the PyTorch module (train-mode BN)."""
    w1, g1, b1, w2, g2, b2, wd = params
    has_ds = wd is not None
    s = int(stride)

    x = jnp.transpose(x_nchw, (0, 2, 3, 1)).astype(jnp.float32)  # -> NHWC
    N, H, W, Cin = x.shape
    Cout = w1.shape[-1]
    H_out = (H + 2 - 3) // s + 1
    W_out = (W + 2 - 3) // s + 1
    HW = H_out * W_out
    M = N * HW
    s2 = s * s
    Hph = H_out + 2 // s
    Wph = W_out + 2 // s

    # Phase-decomposed zero-padded input: total size ~= one copy of x; all
    # conv1 taps become unit-stride static slices inside the kernel.
    xp = jnp.pad(x, ((0, 0), (1, s * Hph - H - 1), (1, s * Wph - W - 1), (0, 0)))
    phases = xp.reshape(N, Hph, s, Wph, s, Cin)
    phases = jnp.transpose(phases, (2, 4, 0, 1, 3, 5)).reshape(s2, N, Hph, Wph, Cin)
    phases = phases.astype(compute_dtype)

    w1f = w1.reshape(9 * Cin, Cout).astype(compute_dtype)
    w2f = w2.reshape(9 * Cout, Cout).astype(compute_dtype)

    cparams_seq = pltpu.CompilerParams(
        dimension_semantics=("arbitrary",),  # batch axis carries BN running sums
        vmem_limit_bytes=_VMEM_LIMIT)
    cparams_par = pltpu.CompilerParams(
        dimension_semantics=("parallel",),
        vmem_limit_bytes=_VMEM_LIMIT)

    stat_shape = jax.ShapeDtypeStruct((1, Cout), jnp.float32)
    stat_spec = pl.BlockSpec((1, Cout), lambda n: (0, 0))
    img_spec = pl.BlockSpec((1, HW, Cout), lambda n: (n, 0, 0))

    # ---- pass 1: conv1 + BN1 partial stats (streamed over images) ----------
    k1 = _make_conv1_kernel(stride=s, H_out=H_out, W_out=W_out, Cin=Cin)
    y1_raw, sum1, sq1, shift1 = pl.pallas_call(
        k1,
        out_shape=(jax.ShapeDtypeStruct((N, HW, Cout), compute_dtype),
                   stat_shape, stat_shape, stat_shape),
        grid_spec=pltpu.PrefetchScalarGridSpec(
            num_scalar_prefetch=0,
            grid=(N,),
            in_specs=[
                pl.BlockSpec((s2, 1, Hph, Wph, Cin), lambda n: (0, n, 0, 0, 0)),
                pl.BlockSpec((9 * Cin, Cout), lambda n: (0, 0)),
            ],
            out_specs=(img_spec, stat_spec, stat_spec, stat_spec)),
        compiler_params=cparams_seq,
    )(phases, w1f)

    inv_m = 1.0 / float(M)
    mean1 = shift1 + sum1 * inv_m
    var1 = sq1 * inv_m - (sum1 * inv_m) ** 2
    a1 = g1.reshape(1, Cout) * jax.lax.rsqrt(var1 + _EPS)
    c1 = b1.reshape(1, Cout) - mean1 * a1

    # ---- pass 2: BN1 -> ReLU -> conv2 + BN2 partial stats (streamed) -------
    k2 = _make_conv2_kernel(H_out=H_out, W_out=W_out, Cout=Cout)
    z_raw, sum2, sq2, shift2 = pl.pallas_call(
        k2,
        out_shape=(jax.ShapeDtypeStruct((N, HW, Cout), compute_dtype),
                   stat_shape, stat_shape, stat_shape),
        grid_spec=pltpu.PrefetchScalarGridSpec(
            num_scalar_prefetch=0,
            grid=(N,),
            in_specs=[
                img_spec,
                stat_spec,
                stat_spec,
                pl.BlockSpec((9 * Cout, Cout), lambda n: (0, 0)),
            ],
            out_specs=(img_spec, stat_spec, stat_spec, stat_spec),
            scratch_shapes=[
                pltpu.VMEM((H_out + 2, W_out + 2, Cout), compute_dtype),
            ]),
        compiler_params=cparams_seq,
    )(y1_raw, a1, c1, w2f)

    mean2 = shift2 + sum2 * inv_m
    var2 = sq2 * inv_m - (sum2 * inv_m) ** 2
    a2 = g2.reshape(1, Cout) * jax.lax.rsqrt(var2 + _EPS)
    c2 = b2.reshape(1, Cout) - mean2 * a2

    # ---- pass 3: BN2 + shortcut + ReLU (independent per image) -------------
    off = 1 // s                    # row/col offset of the shortcut samples
    pd = (1 % s) * s + (1 % s)      # phase plane holding the shortcut samples
    k3 = _make_epilogue_kernel(H_out=H_out, W_out=W_out, Cin=Cin, off=off,
                               has_ds=has_ds, compute_dtype=compute_dtype)
    if has_ds:
        sc_inputs = [phases, wd.astype(compute_dtype)]
        sc_specs = [
            pl.BlockSpec((1, 1, Hph, Wph, Cin), lambda n: (pd, n, 0, 0, 0)),
            pl.BlockSpec((Cin, Cout), lambda n: (0, 0)),
        ]
    else:
        # Identity shortcut: no copy, no matmul — read the f32 input directly.
        sc_inputs = [x.reshape(N, HW, Cin)]
        sc_specs = [pl.BlockSpec((1, HW, Cin), lambda n: (n, 0, 0))]

    out2d = pl.pallas_call(
        k3,
        out_shape=jax.ShapeDtypeStruct((N, HW, Cout), jnp.float32),
        grid_spec=pltpu.PrefetchScalarGridSpec(
            num_scalar_prefetch=0,
            grid=(N,),
            in_specs=[img_spec, stat_spec, stat_spec] + sc_specs,
            out_specs=img_spec),
        compiler_params=cparams_par,
    )(z_raw, a2, c2, *sc_inputs)

    out = out2d.reshape(N, H_out, W_out, Cout)
    return jnp.transpose(out, (0, 3, 1, 2))  # NHWC -> NCHW


def reference(x_nchw, params, stride):
    """Pure-JAX f32 reference with the same training-mode BN semantics."""
    w1, g1, b1, w2, g2, b2, wd = params
    x = jnp.transpose(x_nchw, (0, 2, 3, 1)).astype(jnp.float32)

    def conv3x3(a, w, s):
        return jax.lax.conv_general_dilated(
            a, w, (s, s), ((1, 1), (1, 1)),
            dimension_numbers=('NHWC', 'HWIO', 'NHWC'))

    def bn(a, g, b):
        mean = a.mean(axis=(0, 1, 2), keepdims=True)
        var = ((a - mean) ** 2).mean(axis=(0, 1, 2), keepdims=True)
        return (a - mean) * jax.lax.rsqrt(var + _EPS) * g + b

    out = jax.nn.relu(bn(conv3x3(x, w1, stride), g1, b1))
    out = bn(conv3x3(out, w2, 1), g2, b2)
    if wd is None:
        sc = x[:, ::stride, ::stride, :]
    else:
        sc = jax.lax.conv_general_dilated(
            x, wd[None, None], (stride, stride), 'VALID',
            dimension_numbers=('NHWC', 'HWIO', 'NHWC'))
    return jnp.transpose(jax.nn.relu(out + sc), (0, 3, 1, 2))


if __name__ == "__main__":
    key = jax.random.PRNGKey(0)
    kx1, kx2, kp = jax.random.split(key, 3)

    # Case 1: downsampling block (stride=2, 4 -> 8 channels), NCHW input.
    x = jax.random.normal(kx1, (2, 4, 16, 16), jnp.float32)
    params = init_params(kp, 4, 8, 2)
    ref = reference(x, params, 2)

    out_f32 = jax.block_until_ready(
        residual_block(x, params, 2, compute_dtype=jnp.float32))
    assert out_f32.shape == (2, 8, 8, 8), out_f32.shape
    assert jnp.allclose(out_f32, ref, atol=1e-3, rtol=1e-3), \
        float(jnp.max(jnp.abs(out_f32 - ref)))

    out_bf16 = jax.block_until_ready(residual_block(x, params, 2))
    assert jnp.allclose(out_bf16, ref, atol=5e-2, rtol=5e-2), \
        float(jnp.max(jnp.abs(out_bf16 - ref)))

    # Case 2: identity-shortcut block (stride=1, 8 -> 8 channels).
    x2 = jax.random.normal(kx2, (2, 8, 16, 16), jnp.float32)
    params2 = init_params(kp, 8, 8, 1)
    ref2 = reference(x2, params2, 1)

    out2_f32 = jax.block_until_ready(
        residual_block(x2, params2, 1, compute_dtype=jnp.float32))
    assert out2_f32.shape == (2, 8, 16, 16), out2_f32.shape
    assert jnp.allclose(out2_f32, ref2, atol=1e-3, rtol=1e-3), \
        float(jnp.max(jnp.abs(out2_f32 - ref2)))

    out2_bf16 = jax.block_until_ready(residual_block(x2, params2, 1))
    assert jnp.allclose(out2_bf16, ref2, atol=5e-2, rtol=5e-2), \
        float(jnp.max(jnp.abs(out2_bf16 - ref2)))

    print("KERNEL_OK")
</pallas_src>

<mosaic_0001>
module attributes {stable_mosaic.version = 11 : i64} {
  func.func @kernel(%arg0: i32, %arg1: memref<4x1x9x9x4xf32, #tpu.memory_space<vmem>>, %arg2: memref<36x8xf32, #tpu.memory_space<vmem>>, %arg3: memref<1x64x8xf32, #tpu.memory_space<vmem>>, %arg4: memref<1x8xf32, #tpu.memory_space<vmem>>, %arg5: memref<1x8xf32, #tpu.memory_space<vmem>>, %arg6: memref<1x8xf32, #tpu.memory_space<vmem>>) attributes {dimension_semantics = [#tpu.dimension_semantics<arbitrary>], iteration_bounds = array<i64: 2>, scalar_prefetch = 0 : i64, scratch_operands = 0 : i64, tpu.core_type = #tpu.core_type<tc>, window_params = [{transform_indices = @transform_0, window_bounds = array<i64: 4, 1, 9, 9, 4>}, {pipeline_mode = #tpu.pipeline_mode<synchronous>, transform_indices = @transform_1, window_bounds = array<i64: 36, 8>}, {transform_indices = @transform_2, window_bounds = array<i64: 1, 64, 8>}, {pipeline_mode = #tpu.pipeline_mode<synchronous>, transform_indices = @transform_3, window_bounds = array<i64: 1, 8>}, {pipeline_mode = #tpu.pipeline_mode<synchronous>, transform_indices = @transform_4, window_bounds = array<i64: 1, 8>}, {pipeline_mode = #tpu.pipeline_mode<synchronous>, transform_indices = @transform_5, window_bounds = array<i64: 1, 8>}]} {
    %c0 = arith.constant 0 : index
    %c0_0 = arith.constant 0 : index
    %c0_1 = arith.constant 0 : index
    %c0_2 = arith.constant 0 : index
    %c0_3 = arith.constant 0 : index
    %0 = vector.load %arg1[%c0, %c0_0, %c0_1, %c0_2, %c0_3] : memref<4x1x9x9x4xf32, #tpu.memory_space<vmem>>, vector<1x1x8x8x4xf32>
    %1 = vector.shape_cast %0 : vector<1x1x8x8x4xf32> to vector<8x8x4xf32>
    %2 = vector.shape_cast %1 : vector<8x8x4xf32> to vector<64x4xf32>
    %c1 = arith.constant 1 : index
    %c0_4 = arith.constant 0 : index
    %c0_5 = arith.constant 0 : index
    %c0_6 = arith.constant 0 : index
    %c0_7 = arith.constant 0 : index
    %3 = vector.load %arg1[%c1, %c0_4, %c0_5, %c0_6, %c0_7] : memref<4x1x9x9x4xf32, #tpu.memory_space<vmem>>, vector<1x1x8x8x4xf32>
    %4 = vector.shape_cast %3 : vector<1x1x8x8x4xf32> to vector<8x8x4xf32>
    %5 = vector.shape_cast %4 : vector<8x8x4xf32> to vector<64x4xf32>
    %c0_8 = arith.constant 0 : index
    %c0_9 = arith.constant 0 : index
    %c0_10 = arith.constant 0 : index
    %c1_11 = arith.constant 1 : index
    %c0_12 = arith.constant 0 : index
    %6 = vector.load %arg1[%c0_8, %c0_9, %c0_10, %c1_11, %c0_12] : memref<4x1x9x9x4xf32, #tpu.memory_space<vmem>>, vector<1x1x8x8x4xf32>
    %7 = vector.shape_cast %6 : vector<1x1x8x8x4xf32> to vector<8x8x4xf32>
    %8 = vector.shape_cast %7 : vector<8x8x4xf32> to vector<64x4xf32>
    %c2 = arith.constant 2 : index
    %c0_13 = arith.constant 0 : index
    %c0_14 = arith.constant 0 : index
    %c0_15 = arith.constant 0 : index
    %c0_16 = arith.constant 0 : index
    %9 = vector.load %arg1[%c2, %c0_13, %c0_14, %c0_15, %c0_16] : memref<4x1x9x9x4xf32, #tpu.memory_space<vmem>>, vector<1x1x8x8x4xf32>
    %10 = vector.shape_cast %9 : vector<1x1x8x8x4xf32> to vector<8x8x4xf32>
    %11 = vector.shape_cast %10 : vector<8x8x4xf32> to vector<64x4xf32>
    %c3 = arith.constant 3 : index
    %c0_17 = arith.constant 0 : index
    %c0_18 = arith.constant 0 : index
    %c0_19 = arith.constant 0 : index
    %c0_20 = arith.constant 0 : index
    %12 = vector.load %arg1[%c3, %c0_17, %c0_18, %c0_19, %c0_20] : memref<4x1x9x9x4xf32, #tpu.memory_space<vmem>>, vector<1x1x8x8x4xf32>
    %13 = vector.shape_cast %12 : vector<1x1x8x8x4xf32> to vector<8x8x4xf32>
    %14 = vector.shape_cast %13 : vector<8x8x4xf32> to vector<64x4xf32>
    %c2_21 = arith.constant 2 : index
    %c0_22 = arith.constant 0 : index
    %c0_23 = arith.constant 0 : index
    %c1_24 = arith.constant 1 : index
    %c0_25 = arith.constant 0 : index
    %15 = vector.load %arg1[%c2_21, %c0_22, %c0_23, %c1_24, %c0_25] : memref<4x1x9x9x4xf32, #tpu.memory_space<vmem>>, vector<1x1x8x8x4xf32>
    %16 = vector.shape_cast %15 : vector<1x1x8x8x4xf32> to vector<8x8x4xf32>
    %17 = vector.shape_cast %16 : vector<8x8x4xf32> to vector<64x4xf32>
    %c0_26 = arith.constant 0 : index
    %c0_27 = arith.constant 0 : index
    %c1_28 = arith.constant 1 : index
    %c0_29 = arith.constant 0 : index
    %c0_30 = arith.constant 0 : index
    %18 = vector.load %arg1[%c0_26, %c0_27, %c1_28, %c0_29, %c0_30] : memref<4x1x9x9x4xf32, #tpu.memory_space<vmem>>, vector<1x1x8x8x4xf32>
    %19 = vector.shape_cast %18 : vector<1x1x8x8x4xf32> to vector<8x8x4xf32>
    %20 = vector.shape_cast %19 : vector<8x8x4xf32> to vector<64x4xf32>
    %c1_31 = arith.constant 1 : index
    %c0_32 = arith.constant 0 : index
    %c1_33 = arith.constant 1 : index
    %c0_34 = arith.constant 0 : index
    %c0_35 = arith.constant 0 : index
    %21 = vector.load %arg1[%c1_31, %c0_32, %c1_33, %c0_34, %c0_35] : memref<4x1x9x9x4xf32, #tpu.memory_space<vmem>>, vector<1x1x8x8x4xf32>
    %22 = vector.shape_cast %21 : vector<1x1x8x8x4xf32> to vector<8x8x4xf32>
    %23 = vector.shape_cast %22 : vector<8x8x4xf32> to vector<64x4xf32>
    %c0_36 = arith.constant 0 : index
    %c0_37 = arith.constant 0 : index
    %c1_38 = arith.constant 1 : index
    %c1_39 = arith.constant 1 : index
    %c0_40 = arith.constant 0 : index
    %24 = vector.load %arg1[%c0_36, %c0_37, %c1_38, %c1_39, %c0_40] : memref<4x1x9x9x4xf32, #tpu.memory_space<vmem>>, vector<1x1x8x8x4xf32>
    %25 = vector.shape_cast %24 : vector<1x1x8x8x4xf32> to vector<8x8x4xf32>
    %26 = vector.shape_cast %25 : vector<8x8x4xf32> to vector<64x4xf32>
    %27 = tpu.concatenate %2, %5, %8, %11, %14, %17, %20, %23, %26 in 1 : vector<64x4xf32>, vector<64x4xf32>, vector<64x4xf32>, vector<64x4xf32>, vector<64x4xf32>, vector<64x4xf32>, vector<64x4xf32>, vector<64x4xf32>, vector<64x4xf32> -> vector<64x36xf32>
    %c0_41 = arith.constant 0 : index
    %c0_42 = arith.constant 0 : index
    %28 = vector.load %arg2[%c0_41, %c0_42] : memref<36x8xf32, #tpu.memory_space<vmem>>, vector<36x8xf32>
    %cst = arith.constant dense<0.000000e+00> : vector<64x8xf32>
    %29 = tpu.matmul %27, %28, %cst {dimension_numbers = #tpu.dot_dimension_numbers<[1], [0], [0], [1], [0, 0, 1, 1], [], []>} : vector<64x36xf32>, vector<36x8xf32>, vector<64x8xf32> -> vector<64x8xf32>
    %c0_43 = arith.constant 0 : index
    %c0_44 = arith.constant 0 : index
    %c0_45 = arith.constant 0 : index
    %30 = vector.load %arg3[%c0_43, %c0_44, %c0_45] : memref<1x64x8xf32, #tpu.memory_space<vmem>>, vector<1x64x8xf32>
    %31 = vector.shape_cast %30 : vector<1x64x8xf32> to vector<64x8xf32>
    %32 = vector.shape_cast %29 : vector<64x8xf32> to vector<1x64x8xf32>
    tpu.vector_store %arg3[%c0_43, %c0_44, %c0_45], %32 {strides = array<i32>} : memref<1x64x8xf32, #tpu.memory_space<vmem>>, vector<1x64x8xf32>,
    %c0_i32 = arith.constant 0 : i32
    %33 = arith.cmpi eq, %arg0, %c0_i32 : i32
    %34 = arith.extui %33 : i1 to i32
    %c0_i32_46 = arith.constant 0 : i32
    %35 = arith.cmpi ne, %34, %c0_i32_46 : i32
    scf.if %35 {
      %cst_59 = arith.constant dense<0.000000e+00> : vector<8xf32>
      %50 = vector.multi_reduction <add>, %29, %cst_59 [0] : vector<64x8xf32> to vector<8xf32>
      %51 = vector.shape_cast %50 : vector<8xf32> to vector<1x8xf32>
      %cst_60 = arith.constant 1.562500e-02 : f32
      %52 = vector.broadcast %cst_60 : f32 to vector<1x8xf32>
      %53 = arith.mulf %51, %52 : vector<1x8xf32>
      %c0_61 = arith.constant 0 : index
      %c0_62 = arith.constant 0 : index
      %54 = vector.load %arg6[%c0_61, %c0_62] : memref<1x8xf32, #tpu.memory_space<vmem>>, vector<1x8xf32>
      tpu.vector_store %arg6[%c0_61, %c0_62], %53 {strides = array<i32>} : memref<1x8xf32, #tpu.memory_space<vmem>>, vector<1x8xf32>,
      %cst_63 = arith.constant 0.000000e+00 : f32
      %55 = vector.broadcast %cst_63 : f32 to vector<1x8xf32>
      %c0_64 = arith.constant 0 : index
      %c0_65 = arith.constant 0 : index
      %56 = vector.load %arg4[%c0_64, %c0_65] : memref<1x8xf32, #tpu.memory_space<vmem>>, vector<1x8xf32>
      tpu.vector_store %arg4[%c0_64, %c0_65], %55 {strides = array<i32>} : memref<1x8xf32, #tpu.memory_space<vmem>>, vector<1x8xf32>,
      %cst_66 = arith.constant 0.000000e+00 : f32
      %57 = vector.broadcast %cst_66 : f32 to vector<1x8xf32>
      %c0_67 = arith.constant 0 : index
      %c0_68 = arith.constant 0 : index
      %58 = vector.load %arg5[%c0_67, %c0_68] : memref<1x8xf32, #tpu.memory_space<vmem>>, vector<1x8xf32>
      tpu.vector_store %arg5[%c0_67, %c0_68], %57 {strides = array<i32>} : memref<1x8xf32, #tpu.memory_space<vmem>>, vector<1x8xf32>,
    } else {
    }
    %c0_47 = arith.constant 0 : index
    %c0_48 = arith.constant 0 : index
    %36 = vector.load %arg6[%c0_47, %c0_48] : memref<1x8xf32, #tpu.memory_space<vmem>>, vector<1x8xf32>
    %37 = vector.broadcast %36 : vector<1x8xf32> to vector<64x8xf32>
    %38 = arith.subf %29, %37 : vector<64x8xf32>
    %c0_49 = arith.constant 0 : index
    %c0_50 = arith.constant 0 : index
    %39 = vector.load %arg4[%c0_49, %c0_50] : memref<1x8xf32, #tpu.memory_space<vmem>>, vector<1x8xf32>
    %cst_51 = arith.constant dense<0.000000e+00> : vector<8xf32>
    %40 = vector.multi_reduction <add>, %38, %cst_51 [0] : vector<64x8xf32> to vector<8xf32>
    %41 = vector.shape_cast %40 : vector<8xf32> to vector<1x8xf32>
    %42 = arith.addf %39, %41 : vector<1x8xf32>
    %c0_52 = arith.constant 0 : index
    %c0_53 = arith.constant 0 : index
    %43 = vector.load %arg4[%c0_52, %c0_53] : memref<1x8xf32, #tpu.memory_space<vmem>>, vector<1x8xf32>
    tpu.vector_store %arg4[%c0_52, %c0_53], %42 {strides = array<i32>} : memref<1x8xf32, #tpu.memory_space<vmem>>, vector<1x8xf32>,
    %c0_54 = arith.constant 0 : index
    %c0_55 = arith.constant 0 : index
    %44 = vector.load %arg5[%c0_54, %c0_55] : memref<1x8xf32, #tpu.memory_space<vmem>>, vector<1x8xf32>
    %45 = arith.mulf %38, %38 : vector<64x8xf32>
    %cst_56 = arith.constant dense<0.000000e+00> : vector<8xf32>
    %46 = vector.multi_reduction <add>, %45, %cst_56 [0] : vector<64x8xf32> to vector<8xf32>
    %47 = vector.shape_cast %46 : vector<8xf32> to vector<1x8xf32>
    %48 = arith.addf %44, %47 : vector<1x8xf32>
    %c0_57 = arith.constant 0 : index
    %c0_58 = arith.constant 0 : index
    %49 = vector.load %arg5[%c0_57, %c0_58] : memref<1x8xf32, #tpu.memory_space<vmem>>, vector<1x8xf32>
    tpu.vector_store %arg5[%c0_57, %c0_58], %48 {strides = array<i32>} : memref<1x8xf32, #tpu.memory_space<vmem>>, vector<1x8xf32>,
    return
  }
  func.func @transform_0(%arg0: i32) -> (i32, i32, i32, i32, i32) {
    %c0_i32 = arith.constant 0 : i32
    %c0_i32_0 = arith.constant 0 : i32
    %c0_i32_1 = arith.constant 0 : i32
    %c0_i32_2 = arith.constant 0 : i32
    %c0_i32_3 = arith.constant 0 : i32
    return %c0_i32, %arg0, %c0_i32_0, %c0_i32_1, %c0_i32_2 : i32, i32, i32, i32, i32
  }
  func.func @transform_1(%arg0: i32) -> (i32, i32) {
    %c0_i32 = arith.constant 0 : i32
    %c0_i32_0 = arith.constant 0 : i32
    %c0_i32_1 = arith.constant 0 : i32
    return %c0_i32, %c0_i32_0 : i32, i32
  }
  func.func @transform_2(%arg0: i32) -> (i32, i32, i32) {
    %c0_i32 = arith.constant 0 : i32
    %c0_i32_0 = arith.constant 0 : i32
    %c0_i32_1 = arith.constant 0 : i32
    return %arg0, %c0_i32, %c0_i32_0 : i32, i32, i32
  }
  func.func @transform_3(%arg0: i32) -> (i32, i32) {
    %c0_i32 = arith.constant 0 : i32
    %c0_i32_0 = arith.constant 0 : i32
    %c0_i32_1 = arith.constant 0 : i32
    return %c0_i32, %c0_i32_0 : i32, i32
  }
  func.func @transform_4(%arg0: i32) -> (i32, i32) {
    %c0_i32 = arith.constant 0 : i32
    %c0_i32_0 = arith.constant 0 : i32
    %c0_i32_1 = arith.constant 0 : i32
    return %c0_i32, %c0_i32_0 : i32, i32
  }
  func.func @transform_5(%arg0: i32) -> (i32, i32) {
    %c0_i32 = arith.constant 0 : i32
    %c0_i32_0 = arith.constant 0 : i32
    %c0_i32_1 = arith.constant 0 : i32
    return %c0_i32, %c0_i32_0 : i32, i32
  }
}

</mosaic_0001>

<llo_original>
// kernel: tpu_custom_call.1
$region0: #{tpu_custom_call.1}
  #allocation0 [shape = 'u32[]', space=smem, size = 0x4, offset = 0x4, fixed_abs, tag = 'smem constant byte address 0x4 - core index']
  #allocation1 [shape = 'u32[72,128]{1,0:T(1,128)}', space=vmem, size = 0x9000, scoped, tag = 'internal scratch']
  %s0 = inlined_call_operand.vmem [shape: f32[4,2,9,9,4], index: 0, kind: input, shape index: {}]
  %s1 = inlined_call_operand.vmem [shape: f32[36,8], index: 1, kind: input, shape index: {}]
  %s2 = inlined_call_operand.vmem [shape: f32[2,64,8], index: 2, kind: output, shape index: {0}]
  %s3 = inlined_call_operand.hbm [shape: f32[1,8], index: 3, kind: output, shape index: {1}]
  %s4 = inlined_call_operand.hbm [shape: f32[1,8], index: 4, kind: output, shape index: {2}]
  %s5 = inlined_call_operand.hbm [shape: f32[1,8], index: 5, kind: output, shape index: {3}]
  %6 = xla_tuple %s2, %s3, %s4, %s5
  %s7 = sld [smem:[#allocation0]]
  $region107: #{tpu_custom_call.1} parent=0
    _
  %s9 = ssub.s32 1, %s7
  %s10 = scalar_select 0, %s9, %s7
  $region1: #{tpu_custom_call.1} parent=0
    #allocation2 [shape = 'u8[589824]{0}', space=vmem, size = 0x90000, scoped, tag = 'input window, operand 0']
    #allocation3 [shape = 'u8[512]{0}', space=vmem, size = 0x400, scoped, tag = 'output window, operand 1, single buffered']
    #allocation4 [shape = 's32[2]{0}', space=sflag, size = 0x8, scoped, tag = 'scoped memory for tpu_custom_call.1']
    #allocation5 [shape = 'u8[512]{0}', space=vmem, size = 0x400, scoped, tag = 'output window, operand 2, single buffered']
    #allocation6 [shape = 's32[1]{0}', space=sflag, size = 0x4, scoped, tag = 'scoped memory for tpu_custom_call.1']
    #allocation7 [shape = 'u8[512]{0}', space=vmem, size = 0x400, scoped, tag = 'output window, operand 3, single buffered']
    %11 = vsyncpa [#allocation4], 0
    %12 = vsyncpa [#allocation6], 0
    loop: start=0, step=1, limit=4
    $region2: #{tpu_custom_call.1} parent=1 // loop_pre_header
      _
    $region3: #{tpu_custom_call.1} parent=1 // loop_header
      %s14 = sphi 0, %s18
      %p15 = scmp.ge.s32.totalorder %s14, 4
      %s24 = sphi 0, %s26
      %s27 = sphi 0, %s24
      %s28 = sphi 0, %s27
      %s44 = sphi 0, %s28
      %s48 = sphi 0, %s48
      %s50 = sphi 0, %s48
      %s51 = sphi 0, %s50
      %s65 = sphi 0, %s51
      %s71 = sphi 0, %s73
      %s74 = sphi 0, %s71
      %s75 = sphi 0, %s74
      %s91 = sphi 0, %s75
      %s95 = sphi 0, %s95
      %s97 = sphi 0, %s95
      %s98 = sphi 0, %s97
      %s112 = sphi 0, %s98
      %s116 = sphi 0, %s116
      %s118 = sphi 0, %s116
      %s119 = sphi 0, %s118
      %s133 = sphi 0, %s119
      %s137 = sphi 0, %s137
      %s139 = sphi 0, %s137
      %s140 = sphi 0, %s139
      %s154 = sphi 0, %s140
    $region4: #{tpu_custom_call.1} parent=1 // loop_header_branch
      %17 = sbr.rel (%p15) target = $region8
    $region5: #{tpu_custom_call.1} parent=1 // loop_body
      %s19 = ssub.s32 %s14, 1
      %s20 = ssub.s32 %s14, 2
      %s21 = sadd.s32 %s14, 1
      %s22 = ssub.s32 %s14, %s21
      %p23 = scmp.eq.s32.totalorder %s22, 0
      %s25 = sadd.s32 %s24, 1
      %s26 = scalar_select %p23, %s24, %s25
      %p29 = pneg %p23
      %p30 = scmp.eq.s32.totalorder %s14, 1
      %p31 = por %p29, %p30
      %p32 = scmp.ne.s32.totalorder %s24, %s27
      %p33 = scmp.eq.s32.totalorder %s14, 0
      %p34 = por %p32, %p33
      %p35 = scmp.ne.s32.totalorder %s24, %s27
      %p36 = scmp.eq.s32.totalorder %s19, 1
      %p37 = por %p35, %p36
      %p38 = scmp.ne.s32.totalorder %s27, %s28
      %p39 = scmp.eq.s32.totalorder %s19, 0
      %p40 = por %p38, %p39
      %p41 = scmp.ne.s32.totalorder %s27, %s28
      %p42 = scmp.eq.s32.totalorder %s20, 1
      %p43 = por %p41, %p42
      %p45 = scmp.ne.s32.totalorder %s28, %s44
      %p46 = scmp.eq.s32.totalorder %s20, 0
      %p47 = por %p45, %p46
      %s49 = sadd.s32 %s48, 1
      %p52 = scmp.eq.s32.totalorder %s14, 1
      %p53 = scmp.ne.s32.totalorder %s48, %s50
      %p54 = scmp.eq.s32.totalorder %s14, 0
      %p55 = por %p53, %p54
      %p56 = scmp.ne.s32.totalorder %s48, %s50
      %p57 = scmp.eq.s32.totalorder %s19, 1
      %p58 = por %p56, %p57
      %p59 = scmp.ne.s32.totalorder %s50, %s51
      %p60 = scmp.eq.s32.totalorder %s19, 0
      %p61 = por %p59, %p60
      %p62 = scmp.ne.s32.totalorder %s50, %s51
      %p63 = scmp.eq.s32.totalorder %s20, 1
      %p64 = por %p62, %p63
      %p66 = scmp.ne.s32.totalorder %s51, %s65
      %p67 = scmp.eq.s32.totalorder %s20, 0
      %p68 = por %p66, %p67
      %s69 = ssub.s32 %s14, %s21
      %p70 = scmp.eq.s32.totalorder %s69, 0
      %s72 = sadd.s32 %s71, 1
      %s73 = scalar_select %p70, %s71, %s72
      %p76 = pneg %p70
      %p77 = scmp.eq.s32.totalorder %s14, 1
      %p78 = por %p76, %p77
      %p79 = scmp.ne.s32.totalorder %s71, %s74
      %p80 = scmp.eq.s32.totalorder %s14, 0
      %p81 = por %p79, %p80
      %p82 = scmp.ne.s32.totalorder %s71, %s74
      %p83 = scmp.eq.s32.totalorder %s19, 1
      %p84 = por %p82, %p83
      %p85 = scmp.ne.s32.totalorder %s74, %s75
      %p86 = scmp.eq.s32.totalorder %s19, 0
      %p87 = por %p85, %p86
      %p88 = scmp.ne.s32.totalorder %s74, %s75
      %p89 = scmp.eq.s32.totalorder %s20, 1
      %p90 = por %p88, %p89
      %p92 = scmp.ne.s32.totalorder %s75, %s91
      %p93 = scmp.eq.s32.totalorder %s20, 0
      %p94 = por %p92, %p93
      %s96 = sadd.s32 %s95, 1
      %p99 = scmp.eq.s32.totalorder %s14, 1
      %p100 = scmp.ne.s32.totalorder %s95, %s97
      %p101 = scmp.eq.s32.totalorder %s14, 0
      %p102 = por %p100, %p101
      %p103 = scmp.ne.s32.totalorder %s95, %s97
      %p104 = scmp.eq.s32.totalorder %s19, 1
      %p105 = por %p103, %p104
      %p106 = scmp.ne.s32.totalorder %s97, %s98
      %p107 = scmp.eq.s32.totalorder %s19, 0
      %p108 = por %p106, %p107
      %p109 = scmp.ne.s32.totalorder %s97, %s98
      %p110 = scmp.eq.s32.totalorder %s20, 1
      %p111 = por %p109, %p110
      %p113 = scmp.ne.s32.totalorder %s98, %s112
      %p114 = scmp.eq.s32.totalorder %s20, 0
      %p115 = por %p113, %p114
      %s117 = sadd.s32 %s116, 1
      %p120 = scmp.eq.s32.totalorder %s14, 1
      %p121 = scmp.ne.s32.totalorder %s116, %s118
      %p122 = scmp.eq.s32.totalorder %s14, 0
      %p123 = por %p121, %p122
      %p124 = scmp.ne.s32.totalorder %s116, %s118
      %p125 = scmp.eq.s32.totalorder %s19, 1
      %p126 = por %p124, %p125
      %p127 = scmp.ne.s32.totalorder %s118, %s119
      %p128 = scmp.eq.s32.totalorder %s19, 0
      %p129 = por %p127, %p128
      %p130 = scmp.ne.s32.totalorder %s118, %s119
      %p131 = scmp.eq.s32.totalorder %s20, 1
      %p132 = por %p130, %p131
      %p134 = scmp.ne.s32.totalorder %s119, %s133
      %p135 = scmp.eq.s32.totalorder %s20, 0
      %p136 = por %p134, %p135
      %s138 = sadd.s32 %s137, 1
      %p141 = scmp.eq.s32.totalorder %s14, 1
      %p142 = scmp.ne.s32.totalorder %s137, %s139
      %p143 = scmp.eq.s32.totalorder %s14, 0
      %p144 = por %p142, %p143
      %p145 = scmp.ne.s32.totalorder %s137, %s139
      %p146 = scmp.eq.s32.totalorder %s19, 1
      %p147 = por %p145, %p146
      %p148 = scmp.ne.s32.totalorder %s139, %s140
      %p149 = scmp.eq.s32.totalorder %s19, 0
      %p150 = por %p148, %p149
      %p151 = scmp.ne.s32.totalorder %s139, %s140
      %p152 = scmp.eq.s32.totalorder %s20, 1
      %p153 = por %p151, %p152
      %p155 = scmp.ne.s32.totalorder %s140, %s154
      %p156 = scmp.eq.s32.totalorder %s20, 0
      %p157 = por %p155, %p156
      %p158 = scmp.le.s32.totalorder 1, %s14
      %p159 = scmp.lt.s32.totalorder %s14, 3
      %p160 = pnand %p158, %p159
      %p161 = pneg %p160
      // Predicated region
      $region9: #{tpu_custom_call.1} parent=5 // pred_check
        _
      $region10: #{tpu_custom_call.1} parent=5 // pred_check_branch
        %163 = sbr.rel (%p160) target = $region12
      $region11: #{tpu_custom_call.1} parent=5 // pred_region
        %s164 = ssub.s32 %s14, 1
        // Predicated region
        $region13: #{tpu_custom_call.1} parent=11 // pred_check
          %p165 = pneg %p61
        $region14: #{tpu_custom_call.1} parent=11 // pred_check_branch
          %167 = sbr.rel (%p165) target = $region16
        $region15: #{tpu_custom_call.1} parent=11 // pred_region
          _
        $region16: #{tpu_custom_call.1} parent=11 // pred_fallthru
          _
      $region12: #{tpu_custom_call.1} parent=5 // pred_fallthru
        _
      %p168 = scmp.lt.s32.totalorder %s14, 2
      // Predicated region
      $region17: #{tpu_custom_call.1} parent=5 // pred_check
        %p169 = pneg %p168
      $region18: #{tpu_custom_call.1} parent=5 // pred_check_branch
        %171 = sbr.rel (%p169) target = $region20
      $region19: #{tpu_custom_call.1} parent=5 // pred_region
        // Predicated region
        $region21: #{tpu_custom_call.1} parent=19 // pred_check
          %p172 = pneg %p34
        $region22: #{tpu_custom_call.1} parent=19 // pred_check_branch
          %174 = sbr.rel (%p172) target = $region24
        $region23: #{tpu_custom_call.1} parent=19 // pred_region
          %s175 = sand.u32 %s24, 1
          %s176 = sand.u32 %s24, 1
          %s177 = smul.addr %s176, 576
          %s178 = scalar_lea.vmem [#allocation2], %s177
          %s179 = smul.addr %s14, 18
          %s180 = smul.addr %s179, 8
          %s181 = scalar_lea.vmem %s0, %s180
          // Predicated region
          $region25: #{tpu_custom_call.1} parent=23 // pred_check
            _
          $region26: #{tpu_custom_call.1} parent=23 // pred_check_branch
            %183 = sbr.rel (0) target = $region28
          $region27: #{tpu_custom_call.1} parent=23 // pred_region
            // Predicated region
            $region29: #{tpu_custom_call.1} parent=27 // pred_check
              _
            $region30: #{tpu_custom_call.1} parent=27 // pred_check_branch
              %185 = sbr.rel (0) target = $region32
            $region31: #{tpu_custom_call.1} parent=27 // pred_region
              // Predicated region
              $region44: #{tpu_custom_call.1} parent=31 // pred_check
                _
              $region45: #{tpu_custom_call.1} parent=31 // pred_check_branch
                %343 = sbr.rel (0) target = $region47
              $region46: #{tpu_custom_call.1} parent=31 // pred_region
                loop: start=0, step=1, limit=1
                $region48: #{tpu_custom_call.1} parent=46 // loop_pre_header
                  _
                $region49: #{tpu_custom_call.1} parent=46 // loop_header
                  %s345 = sphi 0, %s349
                  %p346 = scmp.ge.s32.totalorder %s345, 1
                  %s350 = sphi %s181, %s181
                  %s351 = sphi %s178, %s178
                $region50: #{tpu_custom_call.1} parent=46 // loop_header_branch
                  %348 = sbr.rel (%p346) target = $region54
                $region51: #{tpu_custom_call.1} parent=46 // loop_body
                  %v352 = vld [vmem:[%s350] sm:$0xff]
                  %353 = vst [vmem:[%s351] sm:$0xff] %v352
                  %v354 = vld [vmem:[%s350 + $0x8] sm:$0xff]
                  %355 = vst [vmem:[%s351 + $0x8] sm:$0xff] %v354
                  %v356 = vld [vmem:[%s350 + $0x10] sm:$0xff]
                  %357 = vst [vmem:[%s351 + $0x10] sm:$0xff] %v356
                  %v358 = vld [vmem:[%s350 + $0x18] sm:$0xff]
                  %359 = vst [vmem:[%s351 + $0x18] sm:$0xff] %v358
                  %v360 = vld [vmem:[%s350 + $0x20] sm:$0xff]
                  %361 = vst [vmem:[%s351 + $0x20] sm:$0xff] %v360
                  %v362 = vld [vmem:[%s350 + $0x28] sm:$0xff]
                  %363 = vst [vmem:[%s351 + $0x28] sm:$0xff] %v362
                  %v364 = vld [vmem:[%s350 + $0x30] sm:$0xff]
                  %365 = vst [vmem:[%s351 + $0x30] sm:$0xff] %v364
                  %v366 = vld [vmem:[%s350 + $0x38] sm:$0xff]
                  %367 = vst [vmem:[%s351 + $0x38] sm:$0xff] %v366
                  %v368 = vld [vmem:[%s350 + $0x40] sm:$0xff]
                  %369 = vst [vmem:[%s351 + $0x40] sm:$0xff] %v368
                  %v370 = vld [vmem:[%s350 + $0x48] sm:$0xff]
                  %371 = vst [vmem:[%s351 + $0x48] sm:$0xff] %v370
                  %v372 = vld [vmem:[%s350 + $0x50] sm:$0xff]
                  %373 = vst [vmem:[%s351 + $0x50] sm:$0xff] %v372
                  %v374 = vld [vmem:[%s350 + $0x58] sm:$0xff]
                  %375 = vst [vmem:[%s351 + $0x58] sm:$0xff] %v374
                  %v376 = vld [vmem:[%s350 + $0x60] sm:$0xff]
                  %377 = vst [vmem:[%s351 + $0x60] sm:$0xff] %v376
                  %v378 = vld [vmem:[%s350 + $0x68] sm:$0xff]
                  %379 = vst [vmem:[%s351 + $0x68] sm:$0xff] %v378
                  %v380 = vld [vmem:[%s350 + $0x70] sm:$0xff]
                  %381 = vst [vmem:[%s351 + $0x70] sm:$0xff] %v380
                  %v382 = vld [vmem:[%s350 + $0x78] sm:$0xff]
                  %383 = vst [vmem:[%s351 + $0x78] sm:$0xff] %v382
                  %v384 = vld [vmem:[%s350 + $0x80] sm:$0xff]
                  %385 = vst [vmem:[%s351 + $0x80] sm:$0xff] %v384
                  %v386 = vld [vmem:[%s350 + $0x88] sm:$0xff]
                  %387 = vst [vmem:[%s351 + $0x88] sm:$0xff] %v386
                  %v388 = vld [vmem:[%s350 + $0x120] sm:$0xff]
                  %389 = vst [vmem:[%s351 + $0x90] sm:$0xff] %v388
                  %v390 = vld [vmem:[%s350 + $0x128] sm:$0xff]
                  %391 = vst [vmem:[%s351 + $0x98] sm:$0xff] %v390
                  %v392 = vld [vmem:[%s350 + $0x130] sm:$0xff]
                  %393 = vst [vmem:[%s351 + $0xa0] sm:$0xff] %v392
                  %v394 = vld [vmem:[%s350 + $0x138] sm:$0xff]
                  %395 = vst [vmem:[%s351 + $0xa8] sm:$0xff] %v394
                  %v396 = vld [vmem:[%s350 + $0x140] sm:$0xff]
                  %397 = vst [vmem:[%s351 + $0xb0] sm:$0xff] %v396
                  %v398 = vld [vmem:[%s350 + $0x148] sm:$0xff]
                  %399 = vst [vmem:[%s351 + $0xb8] sm:$0xff] %v398
                  %v400 = vld [vmem:[%s350 + $0x150] sm:$0xff]
                  %401 = vst [vmem:[%s351 + $0xc0] sm:$0xff] %v400
                  %v402 = vld [vmem:[%s350 + $0x158] sm:$0xff]
                  %403 = vst [vmem:[%s351 + $0xc8] sm:$0xff] %v402
                  %v404 = vld [vmem:[%s350 + $0x160] sm:$0xff]
                  %405 = vst [vmem:[%s351 + $0xd0] sm:$0xff] %v404
                  %v406 = vld [vmem:[%s350 + $0x168] sm:$0xff]
                  %407 = vst [vmem:[%s351 + $0xd8] sm:$0xff] %v406
                  %v408 = vld [vmem:[%s350 + $0x170] sm:$0xff]
                  %409 = vst [vmem:[%s351 + $0xe0] sm:$0xff] %v408
                  %v410 = vld [vmem:[%s350 + $0x178] sm:$0xff]
                  %411 = vst [vmem:[%s351 + $0xe8] sm:$0xff] %v410
                  %v412 = vld [vmem:[%s350 + $0x180] sm:$0xff]
                  %413 = vst [vmem:[%s351 + $0xf0] sm:$0xff] %v412
                  %v414 = vld [vmem:[%s350 + $0x188] sm:$0xff]
                  %415 = vst [vmem:[%s351 + $0xf8] sm:$0xff] %v414
                  %v416 = vld [vmem:[%s350 + $0x190] sm:$0xff]
                  %417 = vst [vmem:[%s351 + $0x100] sm:$0xff] %v416
                  %v418 = vld [vmem:[%s350 + $0x198] sm:$0xff]
                  %419 = vst [vmem:[%s351 + $0x108] sm:$0xff] %v418
                  %v420 = vld [vmem:[%s350 + $0x1a0] sm:$0xff]
                  %421 = vst [vmem:[%s351 + $0x110] sm:$0xff] %v420
                  %v422 = vld [vmem:[%s350 + $0x1a8] sm:$0xff]
                  %423 = vst [vmem:[%s351 + $0x118] sm:$0xff] %v422
                  %v424 = vld [vmem:[%s350 + $0x240] sm:$0xff]
                  %425 = vst [vmem:[%s351 + $0x120] sm:$0xff] %v424
                  %v426 = vld [vmem:[%s350 + $0x248] sm:$0xff]
                  %427 = vst [vmem:[%s351 + $0x128] sm:$0xff] %v426
                  %v428 = vld [vmem:[%s350 + $0x250] sm:$0xff]
                  %429 = vst [vmem:[%s351 + $0x130] sm:$0xff] %v428
                  %v430 = vld [vmem:[%s350 + $0x258] sm:$0xff]
                  %431 = vst [vmem:[%s351 + $0x138] sm:$0xff] %v430
                  %v432 = vld [vmem:[%s350 + $0x260] sm:$0xff]
                  %433 = vst [vmem:[%s351 + $0x140] sm:$0xff] %v432
                  %v434 = vld [vmem:[%s350 + $0x268] sm:$0xff]
                  %435 = vst [vmem:[%s351 + $0x148] sm:$0xff] %v434
                  %v436 = vld [vmem:[%s350 + $0x270] sm:$0xff]
                  %437 = vst [vmem:[%s351 + $0x150] sm:$0xff] %v436
                  %v438 = vld [vmem:[%s350 + $0x278] sm:$0xff]
                  %439 = vst [vmem:[%s351 + $0x158] sm:$0xff] %v438
                  %v440 = vld [vmem:[%s350 + $0x280] sm:$0xff]
                  %441 = vst [vmem:[%s351 + $0x160] sm:$0xff] %v440
                  %v442 = vld [vmem:[%s350 + $0x288] sm:$0xff]
                  %443 = vst [vmem:[%s351 + $0x168] sm:$0xff] %v442
                  %v444 = vld [vmem:[%s350 + $0x290] sm:$0xff]
                  %445 = vst [vmem:[%s351 + $0x170] sm:$0xff] %v444
                  %v446 = vld [vmem:[%s350 + $0x298] sm:$0xff]
                  %447 = vst [vmem:[%s351 + $0x178] sm:$0xff] %v446
                  %v448 = vld [vmem:[%s350 + $0x2a0] sm:$0xff]
                  %449 = vst [vmem:[%s351 + $0x180] sm:$0xff] %v448
                  %v450 = vld [vmem:[%s350 + $0x2a8] sm:$0xff]
                  %451 = vst [vmem:[%s351 + $0x188] sm:$0xff] %v450
                  %v452 = vld [vmem:[%s350 + $0x2b0] sm:$0xff]
                  %453 = vst [vmem:[%s351 + $0x190] sm:$0xff] %v452
                  %v454 = vld [vmem:[%s350 + $0x2b8] sm:$0xff]
                  %455 = vst [vmem:[%s351 + $0x198] sm:$0xff] %v454
                  %v456 = vld [vmem:[%s350 + $0x2c0] sm:$0xff]
                  %457 = vst [vmem:[%s351 + $0x1a0] sm:$0xff] %v456
                  %v458 = vld [vmem:[%s350 + $0x2c8] sm:$0xff]
                  %459 = vst [vmem:[%s351 + $0x1a8] sm:$0xff] %v458
                  %v460 = vld [vmem:[%s350 + $0x360] sm:$0xff]
                  %461 = vst [vmem:[%s351 + $0x1b0] sm:$0xff] %v460
                  %v462 = vld [vmem:[%s350 + $0x368] sm:$0xff]
                  %463 = vst [vmem:[%s351 + $0x1b8] sm:$0xff] %v462
                  %v464 = vld [vmem:[%s350 + $0x370] sm:$0xff]
                  %465 = vst [vmem:[%s351 + $0x1c0] sm:$0xff] %v464
                  %v466 = vld [vmem:[%s350 + $0x378] sm:$0xff]
                  %467 = vst [vmem:[%s351 + $0x1c8] sm:$0xff] %v466
                  %v468 = vld [vmem:[%s350 + $0x380] sm:$0xff]
                  %469 = vst [vmem:[%s351 + $0x1d0] sm:$0xff] %v468
                  %v470 = vld [vmem:[%s350 + $0x388] sm:$0xff]
                  %471 = vst [vmem:[%s351 + $0x1d8] sm:$0xff] %v470
                  %v472 = vld [vmem:[%s350 + $0x390] sm:$0xff]
                  %473 = vst [vmem:[%s351 + $0x1e0] sm:$0xff] %v472
                  %v474 = vld [vmem:[%s350 + $0x398] sm:$0xff]
                  %475 = vst [vmem:[%s351 + $0x1e8] sm:$0xff] %v474
                  %v476 = vld [vmem:[%s350 + $0x3a0] sm:$0xff]
                  %477 = vst [vmem:[%s351 + $0x1f0] sm:$0xff] %v476
                  %v478 = vld [vmem:[%s350 + $0x3a8] sm:$0xff]
                  %479 = vst [vmem:[%s351 + $0x1f8] sm:$0xff] %v478
                  %v480 = vld [vmem:[%s350 + $0x3b0] sm:$0xff]
                  %481 = vst [vmem:[%s351 + $0x200] sm:$0xff] %v480
                  %v482 = vld [vmem:[%s350 + $0x3b8] sm:$0xff]
                  %483 = vst [vmem:[%s351 + $0x208] sm:$0xff] %v482
                  %v484 = vld [vmem:[%s350 + $0x3c0] sm:$0xff]
                  %485 = vst [vmem:[%s351 + $0x210] sm:$0xff] %v484
                  %v486 = vld [vmem:[%s350 + $0x3c8] sm:$0xff]
                  %487 = vst [vmem:[%s351 + $0x218] sm:$0xff] %v486
                  %v488 = vld [vmem:[%s350 + $0x3d0] sm:$0xff]
                  %489 = vst [vmem:[%s351 + $0x220] sm:$0xff] %v488
                  %v490 = vld [vmem:[%s350 + $0x3d8] sm:$0xff]
                  %491 = vst [vmem:[%s351 + $0x228] sm:$0xff] %v490
                  %v492 = vld [vmem:[%s350 + $0x3e0] sm:$0xff]
                  %493 = vst [vmem:[%s351 + $0x230] sm:$0xff] %v492
                  %v494 = vld [vmem:[%s350 + $0x3e8] sm:$0xff]
                  %495 = vst [vmem:[%s351 + $0x238] sm:$0xff] %v494
                $region52: #{tpu_custom_call.1} parent=46 // loop_footer
                  %s349 = sadd.s32 1, %s345
                $region53: #{tpu_custom_call.1} parent=46 // loop_footer_branch
                  %344 = sbr.rel target = $region49
                $region54: #{tpu_custom_call.1} parent=46 // loop_exit
                  _
              $region47: #{tpu_custom_call.1} parent=31 // pred_fallthru
                _
              // Predicated region
              $region55: #{tpu_custom_call.1} parent=31 // pred_check
                _
              $region56: #{tpu_custom_call.1} parent=31 // pred_check_branch
                %497 = sbr.rel target = $region58
              $region57: #{tpu_custom_call.1} parent=31 // pred_region
                _
              $region58: #{tpu_custom_call.1} parent=31 // pred_fallthru
                _
            $region32: #{tpu_custom_call.1} parent=27 // pred_fallthru
              _
            // Predicated region
            $region33: #{tpu_custom_call.1} parent=27 // pred_check
              _
            $region34: #{tpu_custom_call.1} parent=27 // pred_check_branch
              %187 = sbr.rel target = $region36
            $region35: #{tpu_custom_call.1} parent=27 // pred_region
              %s189 = ssub.s32 256, 1
              loop: start=0, step=1, limit=1
              $region37: #{tpu_custom_call.1} parent=35 // loop_pre_header
                _
              $region38: #{tpu_custom_call.1} parent=35 // loop_header
                %s191 = sphi 0, %s195
                %p192 = scmp.ge.s32.totalorder %s191, 1
                %s196 = sphi %s181, %s181
                %s197 = sphi %s178, %s178
              $region39: #{tpu_custom_call.1} parent=35 // loop_header_branch
                %194 = sbr.rel (%p192) target = $region43
              $region40: #{tpu_custom_call.1} parent=35 // loop_body
                %v198 = vld [vmem:[%s196] sm:%s189]
                %199 = vst [vmem:[%s197] sm:%s189] %v198
                %v200 = vld [vmem:[%s196 + $0x8] sm:%s189]
                %201 = vst [vmem:[%s197 + $0x8] sm:%s189] %v200
                %v202 = vld [vmem:[%s196 + $0x10] sm:%s189]
                %203 = vst [vmem:[%s197 + $0x10] sm:%s189] %v202
                %v204 = vld [vmem:[%s196 + $0x18] sm:%s189]
                %205 = vst [vmem:[%s197 + $0x18] sm:%s189] %v204
                %v206 = vld [vmem:[%s196 + $0x20] sm:%s189]
                %207 = vst [vmem:[%s197 + $0x20] sm:%s189] %v206
                %v208 = vld [vmem:[%s196 + $0x28] sm:%s189]
                %209 = vst [vmem:[%s197 + $0x28] sm:%s189] %v208
                %v210 = vld [vmem:[%s196 + $0x30] sm:%s189]
                %211 = vst [vmem:[%s197 + $0x30] sm:%s189] %v210
                %v212 = vld [vmem:[%s196 + $0x38] sm:%s189]
                %213 = vst [vmem:[%s197 + $0x38] sm:%s189] %v212
                %v214 = vld [vmem:[%s196 + $0x40] sm:%s189]
                %215 = vst [vmem:[%s197 + $0x40] sm:%s189] %v214
                %v216 = vld [vmem:[%s196 + $0x48] sm:%s189]
                %217 = vst [vmem:[%s197 + $0x48] sm:%s189] %v216
                %v218 = vld [vmem:[%s196 + $0x50] sm:%s189]
                %219 = vst [vmem:[%s197 + $0x50] sm:%s189] %v218
                %v220 = vld [vmem:[%s196 + $0x58] sm:%s189]
                %221 = vst [vmem:[%s197 + $0x58] sm:%s189] %v220
                %v222 = vld [vmem:[%s196 + $0x60] sm:%s189]
                %223 = vst [vmem:[%s197 + $0x60] sm:%s189] %v222
                %v224 = vld [vmem:[%s196 + $0x68] sm:%s189]
                %225 = vst [vmem:[%s197 + $0x68] sm:%s189] %v224
                %v226 = vld [vmem:[%s196 + $0x70] sm:%s189]
                %227 = vst [vmem:[%s197 + $0x70] sm:%s189] %v226
                %v228 = vld [vmem:[%s196 + $0x78] sm:%s189]
                %229 = vst [vmem:[%s197 + $0x78] sm:%s189] %v228
                %v230 = vld [vmem:[%s196 + $0x80] sm:%s189]
                %231 = vst [vmem:[%s197 + $0x80] sm:%s189] %v230
                %v232 = vld [vmem:[%s196 + $0x88] sm:%s189]
                %233 = vst [vmem:[%s197 + $0x88] sm:%s189] %v232
                %v234 = vld [vmem:[%s196 + $0x120] sm:%s189]
                %235 = vst [vmem:[%s197 + $0x90] sm:%s189] %v234
                %v236 = vld [vmem:[%s196 + $0x128] sm:%s189]
                %237 = vst [vmem:[%s197 + $0x98] sm:%s189] %v236
                %v238 = vld [vmem:[%s196 + $0x130] sm:%s189]
                %239 = vst [vmem:[%s197 + $0xa0] sm:%s189] %v238
                %v240 = vld [vmem:[%s196 + $0x138] sm:%s189]
                %241 = vst [vmem:[%s197 + $0xa8] sm:%s189] %v240
                %v242 = vld [vmem:[%s196 + $0x140] sm:%s189]
                %243 = vst [vmem:[%s197 + $0xb0] sm:%s189] %v242
                %v244 = vld [vmem:[%s196 + $0x148] sm:%s189]
                %245 = vst [vmem:[%s197 + $0xb8] sm:%s189] %v244
                %v246 = vld [vmem:[%s196 + $0x150] sm:%s189]
                %247 = vst [vmem:[%s197 + $0xc0] sm:%s189] %v246
                %v248 = vld [vmem:[%s196 + $0x158] sm:%s189]
                %249 = vst [vmem:[%s197 + $0xc8] sm:%s189] %v248
                %v250 = vld [vmem:[%s196 + $0x160] sm:%s189]
                %251 = vst [vmem:[%s197 + $0xd0] sm:%s189] %v250
                %v252 = vld [vmem:[%s196 + $0x168] sm:%s189]
                %253 = vst [vmem:[%s197 + $0xd8] sm:%s189] %v252
                %v254 = vld [vmem:[%s196 + $0x170] sm:%s189]
                %255 = vst [vmem:[%s197 + $0xe0] sm:%s189] %v254
                %v256 = vld [vmem:[%s196 + $0x178] sm:%s189]
                %257 = vst [vmem:[%s197 + $0xe8] sm:%s189] %v256
                %v258 = vld [vmem:[%s196 + $0x180] sm:%s189]
                %259 = vst [vmem:[%s197 + $0xf0] sm:%s189] %v258
                %v260 = vld [vmem:[%s196 + $0x188] sm:%s189]
                %261 = vst [vmem:[%s197 + $0xf8] sm:%s189] %v260
                %v262 = vld [vmem:[%s196 + $0x190] sm:%s189]
                %263 = vst [vmem:[%s197 + $0x100] sm:%s189] %v262
                %v264 = vld [vmem:[%s196 + $0x198] sm:%s189]
                %265 = vst [vmem:[%s197 + $0x108] sm:%s189] %v264
                %v266 = vld [vmem:[%s196 + $0x1a0] sm:%s189]
                %267 = vst [vmem:[%s197 + $0x110] sm:%s189] %v266
                %v268 = vld [vmem:[%s196 + $0x1a8] sm:%s189]
                %269 = vst [vmem:[%s197 + $0x118] sm:%s189] %v268
                %v270 = vld [vmem:[%s196 + $0x240] sm:%s189]
                %271 = vst [vmem:[%s197 + $0x120] sm:%s189] %v270
                %v272 = vld [vmem:[%s196 + $0x248] sm:%s189]
                %273 = vst [vmem:[%s197 + $0x128] sm:%s189] %v272
                %v274 = vld [vmem:[%s196 + $0x250] sm:%s189]
                %275 = vst [vmem:[%s197 + $0x130] sm:%s189] %v274
                %v276 = vld [vmem:[%s196 + $0x258] sm:%s189]
                %277 = vst [vmem:[%s197 + $0x138] sm:%s189] %v276
                %v278 = vld [vmem:[%s196 + $0x260] sm:%s189]
                %279 = vst [vmem:[%s197 + $0x140] sm:%s189] %v278
                %v280 = vld [vmem:[%s196 + $0x268] sm:%s189]
                %281 = vst [vmem:[%s197 + $0x148] sm:%s189] %v280
                %v282 = vld [vmem:[%s196 + $0x270] sm:%s189]
                %283 = vst [vmem:[%s197 + $0x150] sm:%s189] %v282
                %v284 = vld [vmem:[%s196 + $0x278] sm:%s189]
                %285 = vst [vmem:[%s197 + $0x158] sm:%s189] %v284
                %v286 = vld [vmem:[%s196 + $0x280] sm:%s189]
                %287 = vst [vmem:[%s197 + $0x160] sm:%s189] %v286
                %v288 = vld [vmem:[%s196 + $0x288] sm:%s189]
                %289 = vst [vmem:[%s197 + $0x168] sm:%s189] %v288
                %v290 = vld [vmem:[%s196 + $0x290] sm:%s189]
                %291 = vst [vmem:[%s197 + $0x170] sm:%s189] %v290
                %v292 = vld [vmem:[%s196 + $0x298] sm:%s189]
                %293 = vst [vmem:[%s197 + $0x178] sm:%s189] %v292
                %v294 = vld [vmem:[%s196 + $0x2a0] sm:%s189]
                %295 = vst [vmem:[%s197 + $0x180] sm:%s189] %v294
                %v296 = vld [vmem:[%s196 + $0x2a8] sm:%s189]
                %297 = vst [vmem:[%s197 + $0x188] sm:%s189] %v296
                %v298 = vld [vmem:[%s196 + $0x2b0] sm:%s189]
                %299 = vst [vmem:[%s197 + $0x190] sm:%s189] %v298
                %v300 = vld [vmem:[%s196 + $0x2b8] sm:%s189]
                %301 = vst [vmem:[%s197 + $0x198] sm:%s189] %v300
                %v302 = vld [vmem:[%s196 + $0x2c0] sm:%s189]
                %303 = vst [vmem:[%s197 + $0x1a0] sm:%s189] %v302
                %v304 = vld [vmem:[%s196 + $0x2c8] sm:%s189]
                %305 = vst [vmem:[%s197 + $0x1a8] sm:%s189] %v304
                %v306 = vld [vmem:[%s196 + $0x360] sm:%s189]
                %307 = vst [vmem:[%s197 + $0x1b0] sm:%s189] %v306
                %v308 = vld [vmem:[%s196 + $0x368] sm:%s189]
                %309 = vst [vmem:[%s197 + $0x1b8] sm:%s189] %v308
                %v310 = vld [vmem:[%s196 + $0x370] sm:%s189]
                %311 = vst [vmem:[%s197 + $0x1c0] sm:%s189] %v310
                %v312 = vld [vmem:[%s196 + $0x378] sm:%s189]
                %313 = vst [vmem:[%s197 + $0x1c8] sm:%s189] %v312
                %v314 = vld [vmem:[%s196 + $0x380] sm:%s189]
                %315 = vst [vmem:[%s197 + $0x1d0] sm:%s189] %v314
                %v316 = vld [vmem:[%s196 + $0x388] sm:%s189]
                %317 = vst [vmem:[%s197 + $0x1d8] sm:%s189] %v316
                %v318 = vld [vmem:[%s196 + $0x390] sm:%s189]
                %319 = vst [vmem:[%s197 + $0x1e0] sm:%s189] %v318
                %v320 = vld [vmem:[%s196 + $0x398] sm:%s189]
                %321 = vst [vmem:[%s197 + $0x1e8] sm:%s189] %v320
                %v322 = vld [vmem:[%s196 + $0x3a0] sm:%s189]
                %323 = vst [vmem:[%s197 + $0x1f0] sm:%s189] %v322
                %v324 = vld [vmem:[%s196 + $0x3a8] sm:%s189]
                %325 = vst [vmem:[%s197 + $0x1f8] sm:%s189] %v324
                %v326 = vld [vmem:[%s196 + $0x3b0] sm:%s189]
                %327 = vst [vmem:[%s197 + $0x200] sm:%s189] %v326
                %v328 = vld [vmem:[%s196 + $0x3b8] sm:%s189]
                %329 = vst [vmem:[%s197 + $0x208] sm:%s189] %v328
                %v330 = vld [vmem:[%s196 + $0x3c0] sm:%s189]
                %331 = vst [vmem:[%s197 + $0x210] sm:%s189] %v330
                %v332 = vld [vmem:[%s196 + $0x3c8] sm:%s189]
                %333 = vst [vmem:[%s197 + $0x218] sm:%s189] %v332
                %v334 = vld [vmem:[%s196 + $0x3d0] sm:%s189]
                %335 = vst [vmem:[%s197 + $0x220] sm:%s189] %v334
                %v336 = vld [vmem:[%s196 + $0x3d8] sm:%s189]
                %337 = vst [vmem:[%s197 + $0x228] sm:%s189] %v336
                %v338 = vld [vmem:[%s196 + $0x3e0] sm:%s189]
                %339 = vst [vmem:[%s197 + $0x230] sm:%s189] %v338
                %v340 = vld [vmem:[%s196 + $0x3e8] sm:%s189]
                %341 = vst [vmem:[%s197 + $0x238] sm:%s189] %v340
              $region41: #{tpu_custom_call.1} parent=35 // loop_footer
                %s195 = sadd.s32 1, %s191
              $region42: #{tpu_custom_call.1} parent=35 // loop_footer_branch
                %190 = sbr.rel target = $region38
              $region43: #{tpu_custom_call.1} parent=35 // loop_exit
                _
            $region36: #{tpu_custom_call.1} parent=27 // pred_fallthru
              _
          $region28: #{tpu_custom_call.1} parent=23 // pred_fallthru
            _
          %498 = vnop
        $region24: #{tpu_custom_call.1} parent=19 // pred_fallthru
          _
      $region20: #{tpu_custom_call.1} parent=5 // pred_fallthru
        _
      %p499 = scmp.le.s32.totalorder 1, %s14
      %p500 = scmp.lt.s32.totalorder %s14, 3
      %p501 = pnand %p499, %p500
      %p502 = pneg %p501
      // Predicated region
      $region59: #{tpu_custom_call.1} parent=5 // pred_check
        _
      $region60: #{tpu_custom_call.1} parent=5 // pred_check_branch
        %504 = sbr.rel (%p501) target = $region62
      $region61: #{tpu_custom_call.1} parent=5 // pred_region
        %s505 = ssub.s32 %s14, 1
        %s506 = sand.u32 %s27, 1
        %s507 = sand.u32 %s27, 1
        %s508 = smul.addr %s507, 576
        %s509 = scalar_lea.vmem [#allocation2], %s508
        // Predicated region
        $region63: #{tpu_custom_call.1} parent=61 // pred_check
          %p510 = pneg %p40
        $region64: #{tpu_custom_call.1} parent=61 // pred_check_branch
          %512 = sbr.rel (%p510) target = $region66
        $region65: #{tpu_custom_call.1} parent=61 // pred_region
          _
        $region66: #{tpu_custom_call.1} parent=61 // pred_fallthru
          _
        %s513 = sand.u32 %s27, 1
        %s514 = sand.u32 %s27, 1
        %s515 = smul.addr %s514, 576
        %s516 = scalar_lea.vmem [#allocation2], %s515
        %p517 = pneg %p40
        %p518 = pneg %p37
        %p519 = pneg %p61
        %p520 = pneg %p58
        %p521 = pneg %p87
        %p522 = pneg %p84
        %p523 = scmp.lt.s32.totalorder %s19, 1
        %s524 = scalar_select %p523, %s19, 1
        %s525 = smul.addr %s524, 8
        %s526 = smul.addr %s525, 8
        %s527 = scalar_lea.vmem %s2, %s526
        %p528 = pneg %p108
        %p529 = pneg %p105
        %p530 = pneg %p129
        %p531 = pneg %p126
        %p532 = pneg %p150
        %p533 = pneg %p147
        %p534 = scmp.lt.s32.totalorder %s19, 1
        %s535 = scalar_select %p534, %s19, 1
        %s536 = smul.addr %s535, 8
        %s537 = smul.addr %s536, 8
        %s538 = scalar_lea.vmem %s2, %s537
        %v539 = vld [vmem:[%s509] sm:$0xff]
        %v540 = vld [vmem:[%s509 + $0x10] sm:$0xff]
        %v541 = vld [vmem:[%s509 + $0x20] sm:$0xff]
        %v542 = vld [vmem:[%s509 + $0x30] sm:$0xff]
        %v543 = vld [vmem:[%s509 + $0x40] sm:$0xff]
        %v544 = vld [vmem:[%s509 + $0x50] sm:$0xff]
        %v545 = vld [vmem:[%s509 + $0x60] sm:$0xff]
        %v546 = vld [vmem:[%s509 + $0x70] sm:$0xff]
        %s547 = scalar_lea.vmem %s509, 144 [#allocation2]
        %v548 = vld [vmem:[%s547] sm:$0xff]
        %v549 = vld [vmem:[%s547 + $0x10] sm:$0xff]
        %v550 = vld [vmem:[%s547 + $0x20] sm:$0xff]
        %v551 = vld [vmem:[%s547 + $0x30] sm:$0xff]
        %v552 = vld [vmem:[%s547 + $0x40] sm:$0xff]
        %v553 = vld [vmem:[%s547 + $0x50] sm:$0xff]
        %v554 = vld [vmem:[%s547 + $0x60] sm:$0xff]
        %v555 = vld [vmem:[%s547 + $0x70] sm:$0xff]
        %v556 = vld [vmem:[%s509 + $0x1] sm:$0xff]
        %v557 = vld [vmem:[%s509 + $0x11] sm:$0xff]
        %v558 = vld [vmem:[%s509 + $0x21] sm:$0xff]
        %v559 = vld [vmem:[%s509 + $0x31] sm:$0xff]
        %v560 = vld [vmem:[%s509 + $0x41] sm:$0xff]
        %v561 = vld [vmem:[%s509 + $0x51] sm:$0xff]
        %v562 = vld [vmem:[%s509 + $0x61] sm:$0xff]
        %v563 = vld [vmem:[%s509 + $0x71] sm:$0xff]
        %s564 = scalar_lea.vmem %s509, 288 [#allocation2]
        %v565 = vld [vmem:[%s564] sm:$0xff]
        %v566 = vld [vmem:[%s564 + $0x10] sm:$0xff]
        %v567 = vld [vmem:[%s564 + $0x20] sm:$0xff]
        %v568 = vld [vmem:[%s564 + $0x30] sm:$0xff]
        %v569 = vld [vmem:[%s564 + $0x40] sm:$0xff]
        %v570 = vld [vmem:[%s564 + $0x50] sm:$0xff]
        %v571 = vld [vmem:[%s564 + $0x60] sm:$0xff]
        %v572 = vld [vmem:[%s564 + $0x70] sm:$0xff]
        %s573 = scalar_lea.vmem %s509, 432 [#allocation2]
        %v574 = vld [vmem:[%s573] sm:$0xff]
        %v575 = vld [vmem:[%s573 + $0x10] sm:$0xff]
        %v576 = vld [vmem:[%s573 + $0x20] sm:$0xff]
        %v577 = vld [vmem:[%s573 + $0x30] sm:$0xff]
        %v578 = vld [vmem:[%s573 + $0x40] sm:$0xff]
        %v579 = vld [vmem:[%s573 + $0x50] sm:$0xff]
        %v580 = vld [vmem:[%s573 + $0x60] sm:$0xff]
        %v581 = vld [vmem:[%s573 + $0x70] sm:$0xff]
        %v582 = vld [vmem:[%s564 + $0x1] sm:$0xff]
        %v583 = vld [vmem:[%s564 + $0x11] sm:$0xff]
        %v584 = vld [vmem:[%s564 + $0x21] sm:$0xff]
        %v585 = vld [vmem:[%s564 + $0x31] sm:$0xff]
        %v586 = vld [vmem:[%s564 + $0x41] sm:$0xff]
        %v587 = vld [vmem:[%s564 + $0x51] sm:$0xff]
        %v588 = vld [vmem:[%s564 + $0x61] sm:$0xff]
        %v589 = vld [vmem:[%s564 + $0x71] sm:$0xff]
        %s590 = scalar_lea.vmem %s509, 16 [#allocation2]
        %v591 = vld [vmem:[%s590] sm:$0xff]
        %v592 = vld [vmem:[%s590 + $0x10] sm:$0xff]
        %v593 = vld [vmem:[%s590 + $0x20] sm:$0xff]
        %v594 = vld [vmem:[%s590 + $0x30] sm:$0xff]
        %v595 = vld [vmem:[%s590 + $0x40] sm:$0xff]
        %v596 = vld [vmem:[%s590 + $0x50] sm:$0xff]
        %v597 = vld [vmem:[%s590 + $0x60] sm:$0xff]
        %v598 = vld [vmem:[%s590 + $0x70] sm:$0xff]
        %s599 = scalar_lea.vmem %s509, 160 [#allocation2]
        %v600 = vld [vmem:[%s599] sm:$0xff]
        %v601 = vld [vmem:[%s599 + $0x10] sm:$0xff]
        %v602 = vld [vmem:[%s599 + $0x20] sm:$0xff]
        %v603 = vld [vmem:[%s599 + $0x30] sm:$0xff]
        %v604 = vld [vmem:[%s599 + $0x40] sm:$0xff]
        %v605 = vld [vmem:[%s599 + $0x50] sm:$0xff]
        %v606 = vld [vmem:[%s599 + $0x60] sm:$0xff]
        %v607 = vld [vmem:[%s599 + $0x70] sm:$0xff]
        %v608 = vld [vmem:[%s590 + $0x1] sm:$0xff]
        %v609 = vld [vmem:[%s590 + $0x11] sm:$0xff]
        %v610 = vld [vmem:[%s590 + $0x21] sm:$0xff]
        %v611 = vld [vmem:[%s590 + $0x31] sm:$0xff]
        %v612 = vld [vmem:[%s590 + $0x41] sm:$0xff]
        %v613 = vld [vmem:[%s590 + $0x51] sm:$0xff]
        %v614 = vld [vmem:[%s590 + $0x61] sm:$0xff]
        %v615 = vld [vmem:[%s590 + $0x71] sm:$0xff]
        %624 = vrot.lane.b32.xlu0 %v548, 4
        %v625 = vpop.permute.xlu0 %624
        %626 = vrot.lane.b32.xlu0 %v549, 4
        %v627 = vpop.permute.xlu0 %626
        %628 = vrot.lane.b32.xlu0 %v550, 4
        %v629 = vpop.permute.xlu0 %628
        %630 = vrot.lane.b32.xlu0 %v551, 4
        %v631 = vpop.permute.xlu0 %630
        %632 = vrot.lane.b32.xlu0 %v552, 4
        %v633 = vpop.permute.xlu0 %632
        %634 = vrot.lane.b32.xlu0 %v553, 4
        %v635 = vpop.permute.xlu0 %634
        %636 = vrot.lane.b32.xlu0 %v554, 4
        %v637 = vpop.permute.xlu0 %636
        %638 = vrot.lane.b32.xlu0 %v555, 4
        %v639 = vpop.permute.xlu0 %638
        %656 = vrot.lane.b32.xlu0 %v556, 8
        %v657 = vpop.permute.xlu0 %656
        %658 = vrot.lane.b32.xlu0 %v557, 8
        %v659 = vpop.permute.xlu0 %658
        %660 = vrot.lane.b32.xlu0 %v558, 8
        %v661 = vpop.permute.xlu0 %660
        %662 = vrot.lane.b32.xlu0 %v559, 8
        %v663 = vpop.permute.xlu0 %662
        %664 = vrot.lane.b32.xlu0 %v560, 8
        %v665 = vpop.permute.xlu0 %664
        %666 = vrot.lane.b32.xlu0 %v561, 8
        %v667 = vpop.permute.xlu0 %666
        %668 = vrot.lane.b32.xlu0 %v562, 8
        %v669 = vpop.permute.xlu0 %668
        %670 = vrot.lane.b32.xlu0 %v563, 8
        %v671 = vpop.permute.xlu0 %670
        %688 = vrot.lane.b32.xlu0 %v565, 12
        %v689 = vpop.permute.xlu0 %688
        %690 = vrot.lane.b32.xlu0 %v566, 12
        %v691 = vpop.permute.xlu0 %690
        %692 = vrot.lane.b32.xlu0 %v567, 12
        %v693 = vpop.permute.xlu0 %692
        %694 = vrot.lane.b32.xlu0 %v568, 12
        %v695 = vpop.permute.xlu0 %694
        %696 = vrot.lane.b32.xlu0 %v569, 12
        %v697 = vpop.permute.xlu0 %696
        %698 = vrot.lane.b32.xlu0 %v570, 12
        %v699 = vpop.permute.xlu0 %698
        %700 = vrot.lane.b32.xlu0 %v571, 12
        %v701 = vpop.permute.xlu0 %700
        %702 = vrot.lane.b32.xlu0 %v572, 12
        %v703 = vpop.permute.xlu0 %702
        %720 = vrot.lane.b32.xlu0 %v574, 16
        %v721 = vpop.permute.xlu0 %720
        %722 = vrot.lane.b32.xlu0 %v575, 16
        %v723 = vpop.permute.xlu0 %722
        %724 = vrot.lane.b32.xlu0 %v576, 16
        %v725 = vpop.permute.xlu0 %724
        %726 = vrot.lane.b32.xlu0 %v577, 16
        %v727 = vpop.permute.xlu0 %726
        %728 = vrot.lane.b32.xlu0 %v578, 16
        %v729 = vpop.permute.xlu0 %728
        %730 = vrot.lane.b32.xlu0 %v579, 16
        %v731 = vpop.permute.xlu0 %730
        %732 = vrot.lane.b32.xlu0 %v580, 16
        %v733 = vpop.permute.xlu0 %732
        %734 = vrot.lane.b32.xlu0 %v581, 16
        %v735 = vpop.permute.xlu0 %734
        %752 = vrot.lane.b32.xlu0 %v582, 20
        %v753 = vpop.permute.xlu0 %752
        %754 = vrot.lane.b32.xlu0 %v583, 20
        %v755 = vpop.permute.xlu0 %754
        %756 = vrot.lane.b32.xlu0 %v584, 20
        %v757 = vpop.permute.xlu0 %756
        %758 = vrot.lane.b32.xlu0 %v585, 20
        %v759 = vpop.permute.xlu0 %758
        %760 = vrot.lane.b32.xlu0 %v586, 20
        %v761 = vpop.permute.xlu0 %760
        %762 = vrot.lane.b32.xlu0 %v587, 20
        %v763 = vpop.permute.xlu0 %762
        %764 = vrot.lane.b32.xlu0 %v588, 20
        %v765 = vpop.permute.xlu0 %764
        %766 = vrot.lane.b32.xlu0 %v589, 20
        %v767 = vpop.permute.xlu0 %766
        %784 = vrot.lane.b32.xlu0 %v591, 24
        %v785 = vpop.permute.xlu0 %784
        %786 = vrot.lane.b32.xlu0 %v592, 24
        %v787 = vpop.permute.xlu0 %786
        %788 = vrot.lane.b32.xlu0 %v593, 24
        %v789 = vpop.permute.xlu0 %788
        %790 = vrot.lane.b32.xlu0 %v594, 24
        %v791 = vpop.permute.xlu0 %790
        %792 = vrot.lane.b32.xlu0 %v595, 24
        %v793 = vpop.permute.xlu0 %792
        %794 = vrot.lane.b32.xlu0 %v596, 24
        %v795 = vpop.permute.xlu0 %794
        %796 = vrot.lane.b32.xlu0 %v597, 24
        %v797 = vpop.permute.xlu0 %796
        %798 = vrot.lane.b32.xlu0 %v598, 24
        %v799 = vpop.permute.xlu0 %798
        %816 = vrot.lane.b32.xlu0 %v600, 28
        %v817 = vpop.permute.xlu0 %816
        %818 = vrot.lane.b32.xlu0 %v601, 28
        %v819 = vpop.permute.xlu0 %818
        %820 = vrot.lane.b32.xlu0 %v602, 28
        %v821 = vpop.permute.xlu0 %820
        %822 = vrot.lane.b32.xlu0 %v603, 28
        %v823 = vpop.permute.xlu0 %822
        %824 = vrot.lane.b32.xlu0 %v604, 28
        %v825 = vpop.permute.xlu0 %824
        %826 = vrot.lane.b32.xlu0 %v605, 28
        %v827 = vpop.permute.xlu0 %826
        %828 = vrot.lane.b32.xlu0 %v606, 28
        %v829 = vpop.permute.xlu0 %828
        %830 = vrot.lane.b32.xlu0 %v607, 28
        %v831 = vpop.permute.xlu0 %830
        %848 = vrot.lane.b32.xlu0 %v608, 32
        %v849 = vpop.permute.xlu0 %848
        %850 = vrot.lane.b32.xlu0 %v609, 32
        %v851 = vpop.permute.xlu0 %850
        %852 = vrot.lane.b32.xlu0 %v610, 32
        %v853 = vpop.permute.xlu0 %852
        %854 = vrot.lane.b32.xlu0 %v611, 32
        %v855 = vpop.permute.xlu0 %854
        %856 = vrot.lane.b32.xlu0 %v612, 32
        %v857 = vpop.permute.xlu0 %856
        %858 = vrot.lane.b32.xlu0 %v613, 32
        %v859 = vpop.permute.xlu0 %858
        %860 = vrot.lane.b32.xlu0 %v614, 32
        %v861 = vpop.permute.xlu0 %860
        %862 = vrot.lane.b32.xlu0 %v615, 32
        %v863 = vpop.permute.xlu0 %862
        %vm872 = vcmask 31744
        %v873 = vsel %vm872, %v539, %v625
        %v874 = vsel %vm872, %v540, %v627
        %v875 = vsel %vm872, %v541, %v629
        %v876 = vsel %vm872, %v542, %v631
        %v877 = vsel %vm872, %v543, %v633
        %v878 = vsel %vm872, %v544, %v635
        %v879 = vsel %vm872, %v545, %v637
        %v880 = vsel %vm872, %v546, %v639
        %vm881 = vcmask 64512
        %v882 = vsel %vm881, %v873, %v657
        %v883 = vsel %vm881, %v874, %v659
        %v884 = vsel %vm881, %v875, %v661
        %v885 = vsel %vm881, %v876, %v663
        %v886 = vsel %vm881, %v877, %v665
        %v887 = vsel %vm881, %v878, %v667
        %v888 = vsel %vm881, %v879, %v669
        %v889 = vsel %vm881, %v880, %v671
        %vm890 = vcmask 97280
        %v891 = vsel %vm890, %v882, %v689
        %v892 = vsel %vm890, %v883, %v691
        %v893 = vsel %vm890, %v884, %v693
        %v894 = vsel %vm890, %v885, %v695
        %v895 = vsel %vm890, %v886, %v697
        %v896 = vsel %vm890, %v887, %v699
        %v897 = vsel %vm890, %v888, %v701
        %v898 = vsel %vm890, %v889, %v703
        %vm899 = vcmask 130048
        %v900 = vsel %vm899, %v891, %v721
        %v901 = vsel %vm899, %v892, %v723
        %v902 = vsel %vm899, %v893, %v725
        %v903 = vsel %vm899, %v894, %v727
        %v904 = vsel %vm899, %v895, %v729
        %v905 = vsel %vm899, %v896, %v731
        %v906 = vsel %vm899, %v897, %v733
        %v907 = vsel %vm899, %v898, %v735
        %vm908 = vcmask 162816
        %v909 = vsel %vm908, %v900, %v753
        %v910 = vsel %vm908, %v901, %v755
        %v911 = vsel %vm908, %v902, %v757
        %v912 = vsel %vm908, %v903, %v759
        %v913 = vsel %vm908, %v904, %v761
        %v914 = vsel %vm908, %v905, %v763
        %v915 = vsel %vm908, %v906, %v765
        %v916 = vsel %vm908, %v907, %v767
        %vm917 = vcmask 195584
        %v918 = vsel %vm917, %v909, %v785
        %v919 = vsel %vm917, %v910, %v787
        %v920 = vsel %vm917, %v911, %v789
        %v921 = vsel %vm917, %v912, %v791
        %v922 = vsel %vm917, %v913, %v793
        %v923 = vsel %vm917, %v914, %v795
        %v924 = vsel %vm917, %v915, %v797
        %v925 = vsel %vm917, %v916, %v799
        %vm926 = vcmask 228352
        %v927 = vsel %vm926, %v918, %v817
        %v928 = vsel %vm926, %v919, %v819
        %v929 = vsel %vm926, %v920, %v821
        %v930 = vsel %vm926, %v921, %v823
        %v931 = vsel %vm926, %v922, %v825
        %v932 = vsel %vm926, %v923, %v827
        %v933 = vsel %vm926, %v924, %v829
        %v934 = vsel %vm926, %v925, %v831
        %vm935 = vcmask 261120
        %v936 = vsel %vm935, %v927, %v849
        %v937 = vsel %vm935, %v928, %v851
        %v938 = vsel %vm935, %v929, %v853
        %v939 = vsel %vm935, %v930, %v855
        %v940 = vsel %vm935, %v931, %v857
        %v941 = vsel %vm935, %v932, %v859
        %v942 = vsel %vm935, %v933, %v861
        %v943 = vsel %vm935, %v934, %v863
        %v944 = vld [vmem:[%s1] sm:$0xff]
        %v945 = vld [vmem:[%s1 + $0x8] sm:$0xff]
        %v946 = vld [vmem:[%s1 + $0x10] sm:$0xff]
        %v947 = vld [vmem:[%s1 + $0x18] sm:$0xff]
        %v948 = vld [vmem:[%s1 + $0x20] sm:$0xf]
        %vm949 = vcmask 293888
        %v951 = vsel %vm949, %v936, 0
        %v954 = vsel %vm949, %v937, 0
        %v957 = vsel %vm949, %v938, 0
        %v960 = vsel %vm949, %v939, 0
        %v963 = vsel %vm949, %v940, 0
        %v966 = vsel %vm949, %v941, 0
        %v969 = vsel %vm949, %v942, 0
        %v972 = vsel %vm949, %v943, 0
        %vm974 = vcmask 1043456
        %v976 = vsel %vm974, %v948, 0
        %978 = vmatpush.msra.mxu0 0.0
        %979 = vmatpush.msra.mxu0 0.0
        %980 = vmatpush.msra.mxu0 0.0
        %981 = vmatpush.msra.mxu0 0.0
        %982 = vmatpush.msra.mxu0 0.0
        %983 = vmatpush.msra.mxu0 0.0
        %984 = vmatpush.msra.mxu0 0.0
        %985 = vmatpush.msra.mxu0 0.0
        %986 = vmatpush.msra.mxu0 0.0
        %987 = vmatpush.msra.mxu0 0.0
        %988 = vmatpush.msra.mxu0 0.0
        %989 = vmatpush.msra.mxu0 %v976
        %990 = vmatpush.msra.mxu0 %v947
        %991 = vmatpush.msra.mxu0 %v946
        %992 = vmatpush.msra.mxu0 %v945
        %993 = vmatpush.msra.mxu0 %v944
        %994 = vmatmul.f32.gmra.mxu0 %v951
        %v995 = vpop.f32.mrf.mxu0
        %v996 = vadd.f32 0.0, %v995
        %997 = vmatmul.f32.gmra.mxu0 %v954
        %v998 = vpop.f32.mrf.mxu0
        %v999 = vadd.f32 0.0, %v998
        %1000 = vmatmul.f32.gmra.mxu0 %v957
        %v1001 = vpop.f32.mrf.mxu0
        %v1002 = vadd.f32 0.0, %v1001
        %1003 = vmatmul.f32.gmra.mxu0 %v960
        %v1004 = vpop.f32.mrf.mxu0
        %v1005 = vadd.f32 0.0, %v1004
        %1006 = vmatmul.f32.gmra.mxu0 %v963
        %v1007 = vpop.f32.mrf.mxu0
        %v1008 = vadd.f32 0.0, %v1007
        %1009 = vmatmul.f32.gmra.mxu0 %v966
        %v1010 = vpop.f32.mrf.mxu0
        %v1011 = vadd.f32 0.0, %v1010
        %1012 = vmatmul.f32.gmra.mxu0 %v969
        %v1013 = vpop.f32.mrf.mxu0
        %v1014 = vadd.f32 0.0, %v1013
        %1015 = vmatmul.f32.gmra.mxu0 %v972
        %v1016 = vpop.f32.mrf.mxu0
        %v1017 = vadd.f32 0.0, %v1016
        %1018 = vdwg.mxu0
        %1019 = vst.msk [vmem:[%s538] sm:$0xff] %vm881, %v996
        %1020 = vst.msk [vmem:[%s538 + $0x8] sm:$0xff] %vm881, %v999
        %1021 = vst.msk [vmem:[%s538 + $0x10] sm:$0xff] %vm881, %v1002
        %1022 = vst.msk [vmem:[%s538 + $0x18] sm:$0xff] %vm881, %v1005
        %1023 = vst.msk [vmem:[%s538 + $0x20] sm:$0xff] %vm881, %v1008
        %1024 = vst.msk [vmem:[%s538 + $0x28] sm:$0xff] %vm881, %v1011
        %1025 = vst.msk [vmem:[%s538 + $0x30] sm:$0xff] %vm881, %v1014
        %1026 = vst.msk [vmem:[%s538 + $0x38] sm:$0xff] %vm881, %v1017
        %p1027 = scmp.eq.s32.totalorder %s19, 0
        // Predicated region
        $region67: #{tpu_custom_call.1} parent=61 // pred_check
          %p1028 = pneg %p1027
        $region68: #{tpu_custom_call.1} parent=61 // pred_check_branch
          %1030 = sbr.rel (%p1028) target = $region70
        $region69: #{tpu_custom_call.1} parent=61 // pred_region
          %v1031 = vsel %vm881, %v996, 0.0
          %v1032 = vsel %vm881, %v999, 0.0
          %v1033 = vadd.f32 %v1031, %v1032
          %v1034 = vsel %vm881, %v1002, 0.0
          %v1035 = vadd.f32 %v1033, %v1034
          %v1036 = vsel %vm881, %v1005, 0.0
          %v1037 = vadd.f32 %v1035, %v1036
          %v1038 = vsel %vm881, %v1008, 0.0
          %v1039 = vadd.f32 %v1037, %v1038
          %v1040 = vsel %vm881, %v1011, 0.0
          %v1041 = vadd.f32 %v1039, %v1040
          %v1042 = vsel %vm881, %v1014, 0.0
          %v1043 = vadd.f32 %v1041, %v1042
          %v1044 = vsel %vm881, %v1017, 0.0
          %v1045 = vadd.f32 %v1043, %v1044
          %v1046 = vrot.slane %v1045, 4
          %v1047 = vadd.f32 %v1045, %v1046
          %v1048 = vrot.slane %v1047, 2
          %v1049 = vadd.f32 %v1047, %v1048
          %v1050 = vrot.slane %v1049, 1
          %v1051 = vadd.f32 %v1049, %v1050
          %v1052 = vmul.f32 %v1051, 0.015625
          %vm1053 = vcmask 57344
          %1054 = vst.msk [vmem:[#allocation7] sm:$0x1] %vm1053, %v1052
          %1055 = vst.msk [vmem:[#allocation3] sm:$0x1] %vm1053, 0.0
          %1056 = vst.msk [vmem:[#allocation5] sm:$0x1] %vm1053, 0.0
        $region70: #{tpu_custom_call.1} parent=61 // pred_fallthru
          _
        %v1057 = vld [vmem:[#allocation7] sm:$0x1]
        %v1059 = vperm.slane %v1057, 0
        %v1061 = vsub.f32 %v996, %v1059
        %v1062 = vsub.f32 %v999, %v1059
        %v1063 = vsub.f32 %v1002, %v1059
        %v1064 = vsub.f32 %v1005, %v1059
        %v1065 = vsub.f32 %v1008, %v1059
        %v1066 = vsub.f32 %v1011, %v1059
        %v1067 = vsub.f32 %v1014, %v1059
        %v1068 = vsub.f32 %v1017, %v1059
        %v1069 = vld [vmem:[#allocation3] sm:$0x1]
        %v1070 = vsel %vm881, %v1061, 0.0
        %v1071 = vsel %vm881, %v1062, 0.0
        %v1072 = vadd.f32 %v1070, %v1071
        %v1073 = vsel %vm881, %v1063, 0.0
        %v1074 = vadd.f32 %v1072, %v1073
        %v1075 = vsel %vm881, %v1064, 0.0
        %v1076 = vadd.f32 %v1074, %v1075
        %v1077 = vsel %vm881, %v1065, 0.0
        %v1078 = vadd.f32 %v1076, %v1077
        %v1079 = vsel %vm881, %v1066, 0.0
        %v1080 = vadd.f32 %v1078, %v1079
        %v1081 = vsel %vm881, %v1067, 0.0
        %v1082 = vadd.f32 %v1080, %v1081
        %v1083 = vsel %vm881, %v1068, 0.0
        %v1084 = vadd.f32 %v1082, %v1083
        %v1085 = vrot.slane %v1084, 4
        %v1086 = vadd.f32 %v1084, %v1085
        %v1087 = vrot.slane %v1086, 2
        %v1088 = vadd.f32 %v1086, %v1087
        %v1089 = vrot.slane %v1088, 1
        %v1090 = vadd.f32 %v1088, %v1089
        %v1091 = vadd.f32 %v1069, %v1090
        %vm1092 = vcmask 57344
        %1093 = vst.msk [vmem:[#allocation3] sm:$0x1] %vm1092, %v1091
        %v1094 = vld [vmem:[#allocation5] sm:$0x1]
        %v1095 = vmul.f32 %v1061, %v1061
        %v1096 = vmul.f32 %v1062, %v1062
        %v1097 = vmul.f32 %v1063, %v1063
        %v1098 = vmul.f32 %v1064, %v1064
        %v1099 = vmul.f32 %v1065, %v1065
        %v1100 = vmul.f32 %v1066, %v1066
        %v1101 = vmul.f32 %v1067, %v1067
        %v1102 = vmul.f32 %v1068, %v1068
        %v1103 = vsel %vm881, %v1095, 0.0
        %v1104 = vsel %vm881, %v1096, 0.0
        %v1105 = vadd.f32 %v1103, %v1104
        %v1106 = vsel %vm881, %v1097, 0.0
        %v1107 = vadd.f32 %v1105, %v1106
        %v1108 = vsel %vm881, %v1098, 0.0
        %v1109 = vadd.f32 %v1107, %v1108
        %v1110 = vsel %vm881, %v1099, 0.0
        %v1111 = vadd.f32 %v1109, %v1110
        %v1112 = vsel %vm881, %v1100, 0.0
        %v1113 = vadd.f32 %v1111, %v1112
        %v1114 = vsel %vm881, %v1101, 0.0
        %v1115 = vadd.f32 %v1113, %v1114
        %v1116 = vsel %vm881, %v1102, 0.0
        %v1117 = vadd.f32 %v1115, %v1116
        %v1118 = vrot.slane %v1117, 4
        %v1119 = vadd.f32 %v1117, %v1118
        %v1120 = vrot.slane %v1119, 2
        %v1121 = vadd.f32 %v1119, %v1120
        %v1122 = vrot.slane %v1121, 1
        %v1123 = vadd.f32 %v1121, %v1122
        %v1124 = vadd.f32 %v1094, %v1123
        %1125 = vst.msk [vmem:[#allocation5] sm:$0x1] %vm1092, %v1124
        %p1126 = scmp.lt.s32.totalorder %s19, 1
        %s1127 = scalar_select %p1126, %s19, 1
        %s1128 = smul.addr %s1127, 8
        %s1129 = smul.addr %s1128, 8
        %s1130 = scalar_lea.vmem %s2, %s1129
        // Predicated region
        $region71: #{tpu_custom_call.1} parent=61 // pred_check
          %p1131 = pneg %p84
        $region72: #{tpu_custom_call.1} parent=61 // pred_check_branch
          %1133 = sbr.rel (%p1131) target = $region74
        $region73: #{tpu_custom_call.1} parent=61 // pred_region
          _
        $region74: #{tpu_custom_call.1} parent=61 // pred_fallthru
          _
        // Predicated region
        $region75: #{tpu_custom_call.1} parent=61 // pred_check
          %p1134 = pneg %p105
        $region76: #{tpu_custom_call.1} parent=61 // pred_check_branch
          %1136 = sbr.rel (%p1134) target = $region78
        $region77: #{tpu_custom_call.1} parent=61 // pred_region
          %1138 = vsyncadd [#allocation4], 0
          %s1140 = sshll.u32 [#allocation3], 4
          %s1141 = int_to_ptr.vmem [resolvable:$true] %s1140
          %s1142 = sshll.u32 %s3, 4
          %s1143 = int_to_ptr.hbm [resolvable:$true] %s1142
          %1145 = dma.vmem_to_hbm [thread:$0]  %s1141, 16, %s1143, [#allocation4]
        $region78: #{tpu_custom_call.1} parent=61 // pred_fallthru
          _
        // Predicated region
        $region79: #{tpu_custom_call.1} parent=61 // pred_check
          %p1146 = pneg %p126
        $region80: #{tpu_custom_call.1} parent=61 // pred_check_branch
          %1148 = sbr.rel (%p1146) target = $region82
        $region81: #{tpu_custom_call.1} parent=61 // pred_region
          %1150 = vsyncadd [#allocation6], 0
          %s1152 = sshll.u32 [#allocation5], 4
          %s1153 = int_to_ptr.vmem [resolvable:$true] %s1152
          %s1154 = sshll.u32 %s4, 4
          %s1155 = int_to_ptr.hbm [resolvable:$true] %s1154
          %1157 = dma.vmem_to_hbm [thread:$0]  %s1153, 16, %s1155, [#allocation6]
        $region82: #{tpu_custom_call.1} parent=61 // pred_fallthru
          _
        // Predicated region
        $region83: #{tpu_custom_call.1} parent=61 // pred_check
          %p1158 = pneg %p147
        $region84: #{tpu_custom_call.1} parent=61 // pred_check_branch
          %1160 = sbr.rel (%p1158) target = $region86
        $region85: #{tpu_custom_call.1} parent=61 // pred_region
          %1162 = vsyncadd [#allocation6], 0
          %s1164 = sshll.u32 [#allocation7], 4
          %s1165 = int_to_ptr.vmem [resolvable:$true] %s1164
          %s1166 = sshll.u32 %s5, 4
          %s1167 = int_to_ptr.hbm [resolvable:$true] %s1166
          %1169 = dma.vmem_to_hbm [thread:$0]  %s1165, 16, %s1167, [#allocation6]
        $region86: #{tpu_custom_call.1} parent=61 // pred_fallthru
          _
        // Predicated region
        $region87: #{tpu_custom_call.1} parent=61 // pred_check
          %p1170 = pneg %p105
        $region88: #{tpu_custom_call.1} parent=61 // pred_check_branch
          %1172 = sbr.rel (%p1170) target = $region90
        $region89: #{tpu_custom_call.1} parent=61 // pred_region
          %1174 = dma.done [#allocation4], 16
        $region90: #{tpu_custom_call.1} parent=61 // pred_fallthru
          _
        // Predicated region
        $region91: #{tpu_custom_call.1} parent=61 // pred_check
          %p1175 = pneg %p126
        $region92: #{tpu_custom_call.1} parent=61 // pred_check_branch
          %1177 = sbr.rel (%p1175) target = $region94
        $region93: #{tpu_custom_call.1} parent=61 // pred_region
          %1179 = dma.done [#allocation6], 16
        $region94: #{tpu_custom_call.1} parent=61 // pred_fallthru
          _
        // Predicated region
        $region95: #{tpu_custom_call.1} parent=61 // pred_check
          %p1180 = pneg %p147
        $region96: #{tpu_custom_call.1} parent=61 // pred_check_branch
          %1182 = sbr.rel (%p1180) target = $region98
        $region97: #{tpu_custom_call.1} parent=61 // pred_region
          %1184 = dma.done [#allocation6], 16
        $region98: #{tpu_custom_call.1} parent=61 // pred_fallthru
          _
      $region62: #{tpu_custom_call.1} parent=5 // pred_fallthru
        _
      %p1185 = scmp.le.s32.totalorder 2, %s14
      // Predicated region
      $region99: #{tpu_custom_call.1} parent=5 // pred_check
        %p1186 = pneg %p1185
      $region100: #{tpu_custom_call.1} parent=5 // pred_check_branch
        %1188 = sbr.rel (%p1186) target = $region102
      $region101: #{tpu_custom_call.1} parent=5 // pred_region
        %s1189 = ssub.s32 %s14, 2
        // Predicated region
        $region103: #{tpu_custom_call.1} parent=101 // pred_check
          %p1190 = pneg %p90
        $region104: #{tpu_custom_call.1} parent=101 // pred_check_branch
          %1192 = sbr.rel (%p1190) target = $region106
        $region105: #{tpu_custom_call.1} parent=101 // pred_region
          %p1193 = scmp.lt.s32.totalorder %s20, 1
          %s1194 = scalar_select %p1193, %s20, 1
          %s1195 = smul.addr %s1194, 8
          %s1196 = smul.addr %s1195, 8
          %s1197 = scalar_lea.vmem %s2, %s1196
        $region106: #{tpu_custom_call.1} parent=101 // pred_fallthru
          _
      $region102: #{tpu_custom_call.1} parent=5 // pred_fallthru
        _
    $region6: #{tpu_custom_call.1} parent=1 // loop_footer
      %s18 = sadd.s32 1, %s14
    $region7: #{tpu_custom_call.1} parent=1 // loop_footer_branch
      %13 = sbr.rel target = $region3
    $region8: #{tpu_custom_call.1} parent=1 // loop_exit
      _
    %1198 = vsyncpa [#allocation4], 1
    %s1199 = scalar_lea.sflag [#allocation4], 1
    %1200 = vsyncpa %s1199, 1
    %1201 = vsyncpa [#allocation6], 1

</llo_original>
